<compile_context>
chip_gen: v7x
topology: tpu7x:2x2x1
jax: 0.10.0
libtpu: 0.0.40
codegen_flags: <defaults>
</compile_context>

<pallas_src>
import jax
import jax.numpy as jnp
from jax.experimental import pallas as pl
from jax.experimental.pallas import tpu as pltpu

LANE = 128      # TPU lane width (last dim)
SUBLANE = 8     # f32 sublane width (second-to-last dim)


def _round_up(x, m):
    return (x + m - 1) // m * m


def _hw_params():
    """Generation-aware (vmem_capacity_bytes, mxu_m, min_parallel_grid_steps)."""
    try:
        kind = jax.devices()[0].device_kind.lower()
    except Exception:
        kind = ""
    vmem_cap = None
    try:
        vmem_cap = int(pltpu.get_tpu_info().vmem_capacity_bytes)
    except Exception:
        vmem_cap = None
    if vmem_cap is None:
        vmem_cap = (64 << 20) if "v7" in kind else (128 << 20)
    # v2-v5 chips have 128x128 MXUs; v6e/v7x have 2x256x256.
    small_mxu = any(v in kind for v in ("v2", "v3", "v4", "v5"))
    mxu_m = 128 if small_mxu else 256
    # v7x has 2 TensorCores per chip -> want >=2 grid steps on the "parallel" axis.
    min_steps = 2 if "v7" in kind else 1
    return vmem_cap, mxu_m, min_steps


def _make_mlp_kernel(num_layers):
    """Fused MLP kernel over one batch tile.

    refs = (x_ref, w0_ref, b0_ref, ..., w{L-1}_ref, b{L-1}_ref, out_ref)
    Hidden layers: ReLU. Final layer: sigmoid (matches the PyTorch module).
    """

    def kernel(*refs):
        x_ref = refs[0]
        out_ref = refs[-1]
        param_refs = refs[1:-1]

        x = x_ref[...]                        # already bf16 (cast in the wrapper)
        for i in range(num_layers):
            w = param_refs[2 * i][...]        # bf16 [in_pad, out_pad], VMEM-resident
            b = param_refs[2 * i + 1][...]    # f32  [1, out_pad],      VMEM-resident
            y = jnp.dot(x, w, preferred_element_type=jnp.float32) + b
            if i < num_layers - 1:
                x = jnp.maximum(y, 0.0).astype(jnp.bfloat16)          # ReLU (VPU)
            else:
                # sigmoid = 1 / (1 + exp(-y)); exp + approx reciprocal both run on
                # the EUP slot -> near-free epilogue.
                sig = pl.reciprocal(1.0 + jnp.exp(-y), approx=True)
                out_ref[...] = sig.astype(out_ref.dtype)

    return kernel


def _footprint_bytes(tb, dims_pad, bytes_w, bytes_b):
    """Approximate VMEM footprint for one batch tile (single-buffered params)."""
    stream = 2 * tb * (dims_pad[0] * 2 + dims_pad[-1] * 4)   # double-buffered x (bf16) / out (f32)
    inter = tb * sum(dims_pad[1:]) * 6                       # per-layer f32 y + bf16 x copy
    return bytes_w + bytes_b + stream + inter


def _pick_batch_tile(batch, dims_pad, vmem_cap, mxu_m, min_steps, requested=None):
    """Batch tile that fills the MXU M dim, respects VMEM and feeds both v7x cores."""
    batch_su = _round_up(batch, SUBLANE)
    if requested is not None:
        return max(SUBLANE, min(_round_up(requested, SUBLANE), batch_su))

    bytes_w = sum(di * do * 2 for di, do in zip(dims_pad[:-1], dims_pad[1:]))  # bf16
    bytes_b = sum(do * 4 for do in dims_pad[1:])                               # f32
    budget = max(16 << 20, vmem_cap - (16 << 20))   # headroom for Mosaic scratch/sems

    # Fill the MXU M dimension when the batch allows; never below 64 by choice.
    tb = min(mxu_m, batch_su) if batch_su >= 64 else batch_su
    # v7x: make sure both TensorCores get at least one batch tile.
    if min_steps > 1 and _round_up(batch_su, tb) // tb < min_steps and tb > 64:
        tb = max(64, _round_up(tb // min_steps, SUBLANE))
    # Shrink only if the VMEM budget demands it (below 64 only as a last resort).
    while tb > SUBLANE and _footprint_bytes(tb, dims_pad, bytes_w, bytes_b) > budget:
        tb = max(SUBLANE, _round_up(tb // 2, SUBLANE))
        if tb == SUBLANE:
            break
    return tb


def multilayer_network_forward(x, weights, biases, *, batch_tile=None):
    """Run the fused MLP Pallas kernel.

    Args:
      x:        [batch, n_in] float32
      weights:  list of [in_i, out_i] float32 (transposed vs. torch's [out, in])
      biases:   list of [1, out_i] float32
      batch_tile: optional batch tile size override.
    Returns:
      [batch, n_out] float32
    """
    num_layers = len(weights)
    batch, n_in = x.shape
    n_out = weights[-1].shape[1]

    vmem_cap, mxu_m, min_steps = _hw_params()

    # ---- pad feature dims to lane-dense multiples of 128 -------------------
    dims = [n_in] + [w.shape[1] for w in weights]
    dims_pad = [_round_up(d, LANE) for d in dims]

    tb = _pick_batch_tile(batch, dims_pad, vmem_cap, mxu_m, min_steps, batch_tile)
    batch_pad = _round_up(batch, tb)

    # x streamed as bf16 (halves the per-step HBM->VMEM bytes); the cast is fused
    # into the pad copy that is materialized anyway.
    x_pad = jnp.pad(x, ((0, batch_pad - batch), (0, dims_pad[0] - n_in))).astype(jnp.bfloat16)
    w_pad, b_pad = [], []
    for li, (w, b) in enumerate(zip(weights, biases)):
        d_in, d_out = dims_pad[li], dims_pad[li + 1]
        w_pad.append(
            jnp.pad(w, ((0, d_in - w.shape[0]), (0, d_out - w.shape[1]))).astype(jnp.bfloat16)
        )
        b_pad.append(jnp.pad(b, ((0, 0), (0, d_out - b.shape[1]))).astype(jnp.float32))

    operands = [x_pad]
    for w, b in zip(w_pad, b_pad):
        operands.append(w)
        operands.append(b)

    # ---- VMEM budget & cost estimate ----------------------------------------
    bytes_w = sum(int(w.size) * 2 for w in w_pad)
    bytes_b = sum(int(b.size) * 4 for b in b_pad)
    footprint = _footprint_bytes(tb, dims_pad, bytes_w, bytes_b)
    headroom = 12 << 20                                  # leave room for Mosaic scratch
    vmem_limit = int(min(max(32 << 20, footprint + (4 << 20)), vmem_cap - headroom))

    flops = 2 * batch_pad * sum(di * do for di, do in zip(dims_pad[:-1], dims_pad[1:]))
    bytes_accessed = (
        int(x_pad.size) * 2 + bytes_w + bytes_b + batch_pad * dims_pad[-1] * 4
    )
    cost = pl.CostEstimate(
        flops=flops,
        transcendentals=batch_pad * dims_pad[-1],        # sigmoid exp on the output tile
        bytes_accessed=bytes_accessed,
    )

    kernel = _make_mlp_kernel(num_layers)
    out_shape = jax.ShapeDtypeStruct((batch_pad, dims_pad[-1]), jnp.float32)
    out_specs = pl.BlockSpec((tb, dims_pad[-1]), lambda i: (i, 0))

    def _build_in_specs(single_buffer_params):
        # x / out: one batch tile per grid step; weights / biases: constant block
        # index -> resident in VMEM across batch tiles (re-DMA skipped). With
        # single_buffer_params they are also allocated single-buffered, since the
        # second pipeline buffer is pure waste for a never-changing block.
        specs = [pl.BlockSpec((tb, dims_pad[0]), lambda i: (i, 0))]
        for w, b in zip(w_pad, b_pad):
            if single_buffer_params:
                specs.append(pl.BlockSpec(w.shape, lambda i: (0, 0),
                                          pipeline_mode=pl.Buffered(1)))
                specs.append(pl.BlockSpec(b.shape, lambda i: (0, 0),
                                          pipeline_mode=pl.Buffered(1)))
            else:
                specs.append(pl.BlockSpec(w.shape, lambda i: (0, 0)))
                specs.append(pl.BlockSpec(b.shape, lambda i: (0, 0)))
        return specs

    def _run(single_buffer_params):
        return pl.pallas_call(
            kernel,
            out_shape=out_shape,
            grid=(batch_pad // tb,),
            in_specs=_build_in_specs(single_buffer_params),
            out_specs=out_specs,
            compiler_params=pltpu.CompilerParams(
                dimension_semantics=("parallel",),       # batch tiles are independent
                vmem_limit_bytes=vmem_limit,
            ),
            cost_estimate=cost,
        )(*operands)

    try:
        out_pad = _run(True)       # preferred: single-buffered resident params
    except Exception:
        out_pad = _run(False)      # fallback: default double-buffering

    return out_pad[:batch, :n_out]


def init_params(key, n_in, n_hiddens, n_out):
    """Deterministic init mimicking torch.nn.Linear default U[-1/sqrt(fan_in), 1/sqrt(fan_in)]."""
    dims_in = [n_in] + list(n_hiddens)
    dims_out = list(n_hiddens) + [n_out]
    weights, biases = [], []
    for d_in, d_out in zip(dims_in, dims_out):
        key, kw, kb = jax.random.split(key, 3)
        bound = 1.0 / jnp.sqrt(jnp.float32(d_in))
        # torch stores W as [out, in]; we lay it out as [in, out] so the kernel does x @ W + b.
        weights.append(jax.random.uniform(kw, (d_in, d_out), jnp.float32, -bound, bound))
        biases.append(jax.random.uniform(kb, (1, d_out), jnp.float32, -bound, bound))
    return weights, biases


def reference_forward(x, weights, biases):
    """Plain-JAX f32 reference matching the PyTorch forward."""
    h = x
    for w, b in zip(weights[:-1], biases[:-1]):
        h = jax.nn.relu(h @ w + b)
    return jax.nn.sigmoid(h @ weights[-1] + biases[-1])


if __name__ == "__main__":
    # Small shapes consistent with the module (n_in, [hidden...], n_out=1).
    n_in, n_hiddens, n_out = 4, [32, 16], 1
    batch = 128   # fills the MXU M dim on v5e/v6e (single tile); splits 2x64 on v7x

    key = jax.random.PRNGKey(0)
    key_x, key_p = jax.random.split(key)
    x = jax.random.normal(key_x, (batch, n_in), jnp.float32)
    weights, biases = init_params(key_p, n_in, n_hiddens, n_out)

    out = multilayer_network_forward(x, weights, biases)
    out = jax.block_until_ready(out)

    ref = reference_forward(x, weights, biases)
    assert out.shape == (batch, n_out)
    # bf16 matmul inputs with f32 accumulation (+ approx reciprocal in sigmoid):
    # compare against the f32 reference with a correspondingly looser tolerance.
    assert jnp.allclose(out, ref, atol=2e-2, rtol=2e-2), "mismatch vs reference"

    print("KERNEL_OK")
</pallas_src>

<mosaic_0001>
module attributes {stable_mosaic.version = 11 : i64} {
  func.func @kernel(%arg0: i32, %arg1: memref<128x128xbf16, #tpu.memory_space<vmem>>, %arg2: memref<128x128xbf16, #tpu.memory_space<vmem>>, %arg3: memref<1x128xf32, #tpu.memory_space<vmem>>, %arg4: memref<128x128xbf16, #tpu.memory_space<vmem>>, %arg5: memref<1x128xf32, #tpu.memory_space<vmem>>, %arg6: memref<128x128xbf16, #tpu.memory_space<vmem>>, %arg7: memref<1x128xf32, #tpu.memory_space<vmem>>, %arg8: memref<128x128xf32, #tpu.memory_space<vmem>>) attributes {dimension_semantics = [#tpu.dimension_semantics<parallel>], iteration_bounds = array<i64: 1>, scalar_prefetch = 0 : i64, scratch_operands = 0 : i64, tpu.core_type = #tpu.core_type<tc>, window_params = [{transform_indices = @transform_0, window_bounds = array<i64: 128, 128>}, {pipeline_mode = #tpu.pipeline_mode<synchronous>, transform_indices = @transform_1, window_bounds = array<i64: 128, 128>}, {pipeline_mode = #tpu.pipeline_mode<synchronous>, transform_indices = @transform_2, window_bounds = array<i64: 1, 128>}, {pipeline_mode = #tpu.pipeline_mode<synchronous>, transform_indices = @transform_3, window_bounds = array<i64: 128, 128>}, {pipeline_mode = #tpu.pipeline_mode<synchronous>, transform_indices = @transform_4, window_bounds = array<i64: 1, 128>}, {pipeline_mode = #tpu.pipeline_mode<synchronous>, transform_indices = @transform_5, window_bounds = array<i64: 128, 128>}, {pipeline_mode = #tpu.pipeline_mode<synchronous>, transform_indices = @transform_6, window_bounds = array<i64: 1, 128>}, {transform_indices = @transform_7, window_bounds = array<i64: 128, 128>}]} {
    %c0 = arith.constant 0 : index
    %c0_0 = arith.constant 0 : index
    %0 = vector.load %arg1[%c0, %c0_0] : memref<128x128xbf16, #tpu.memory_space<vmem>>, vector<128x128xbf16>
    %c0_1 = arith.constant 0 : index
    %c0_2 = arith.constant 0 : index
    %1 = vector.load %arg2[%c0_1, %c0_2] : memref<128x128xbf16, #tpu.memory_space<vmem>>, vector<128x128xbf16>
    %c0_3 = arith.constant 0 : index
    %c0_4 = arith.constant 0 : index
    %2 = vector.load %arg3[%c0_3, %c0_4] : memref<1x128xf32, #tpu.memory_space<vmem>>, vector<1x128xf32>
    %cst = arith.constant dense<0.000000e+00> : vector<128x128xf32>
    %3 = tpu.matmul %0, %1, %cst {dimension_numbers = #tpu.dot_dimension_numbers<[1], [0], [0], [1], [0, 0, 1, 1], [], []>} : vector<128x128xbf16>, vector<128x128xbf16>, vector<128x128xf32> -> vector<128x128xf32>
    %4 = vector.broadcast %2 : vector<1x128xf32> to vector<128x128xf32>
    %5 = arith.addf %3, %4 : vector<128x128xf32>
    %cst_5 = arith.constant 0.000000e+00 : f32
    %6 = vector.broadcast %cst_5 : f32 to vector<128x128xf32>
    %7 = arith.maximumf %5, %6 : vector<128x128xf32>
    %8 = arith.truncf %7 : vector<128x128xf32> to vector<128x128xbf16>
    %c0_6 = arith.constant 0 : index
    %c0_7 = arith.constant 0 : index
    %9 = vector.load %arg4[%c0_6, %c0_7] : memref<128x128xbf16, #tpu.memory_space<vmem>>, vector<128x128xbf16>
    %c0_8 = arith.constant 0 : index
    %c0_9 = arith.constant 0 : index
    %10 = vector.load %arg5[%c0_8, %c0_9] : memref<1x128xf32, #tpu.memory_space<vmem>>, vector<1x128xf32>
    %cst_10 = arith.constant dense<0.000000e+00> : vector<128x128xf32>
    %11 = tpu.matmul %8, %9, %cst_10 {dimension_numbers = #tpu.dot_dimension_numbers<[1], [0], [0], [1], [0, 0, 1, 1], [], []>} : vector<128x128xbf16>, vector<128x128xbf16>, vector<128x128xf32> -> vector<128x128xf32>
    %12 = vector.broadcast %10 : vector<1x128xf32> to vector<128x128xf32>
    %13 = arith.addf %11, %12 : vector<128x128xf32>
    %cst_11 = arith.constant 0.000000e+00 : f32
    %14 = vector.broadcast %cst_11 : f32 to vector<128x128xf32>
    %15 = arith.maximumf %13, %14 : vector<128x128xf32>
    %16 = arith.truncf %15 : vector<128x128xf32> to vector<128x128xbf16>
    %c0_12 = arith.constant 0 : index
    %c0_13 = arith.constant 0 : index
    %17 = vector.load %arg6[%c0_12, %c0_13] : memref<128x128xbf16, #tpu.memory_space<vmem>>, vector<128x128xbf16>
    %c0_14 = arith.constant 0 : index
    %c0_15 = arith.constant 0 : index
    %18 = vector.load %arg7[%c0_14, %c0_15] : memref<1x128xf32, #tpu.memory_space<vmem>>, vector<1x128xf32>
    %cst_16 = arith.constant dense<0.000000e+00> : vector<128x128xf32>
    %19 = tpu.matmul %16, %17, %cst_16 {dimension_numbers = #tpu.dot_dimension_numbers<[1], [0], [0], [1], [0, 0, 1, 1], [], []>} : vector<128x128xbf16>, vector<128x128xbf16>, vector<128x128xf32> -> vector<128x128xf32>
    %20 = vector.broadcast %18 : vector<1x128xf32> to vector<128x128xf32>
    %21 = arith.addf %19, %20 : vector<128x128xf32>
    %cst_17 = arith.constant 0.000000e+00 : f32
    %22 = vector.broadcast %cst_17 : f32 to vector<128x128xf32>
    %23 = arith.subf %22, %21 : vector<128x128xf32>
    %24 = math.exp %23 : vector<128x128xf32>
    %cst_18 = arith.constant 1.000000e+00 : f32
    %25 = vector.broadcast %cst_18 : f32 to vector<128x128xf32>
    %26 = arith.addf %25, %24 : vector<128x128xf32>
    %27 = tpu.reciprocal %26 {approx = true} : vector<128x128xf32> -> vector<128x128xf32>
    %c0_19 = arith.constant 0 : index
    %c0_20 = arith.constant 0 : index
    %28 = vector.load %arg8[%c0_19, %c0_20] : memref<128x128xf32, #tpu.memory_space<vmem>>, vector<128x128xf32>
    tpu.vector_store %arg8[%c0_19, %c0_20], %27 {strides = array<i32>} : memref<128x128xf32, #tpu.memory_space<vmem>>, vector<128x128xf32>,
    return
  }
  func.func @transform_0(%arg0: i32) -> (i32, i32) {
    %c0_i32 = arith.constant 0 : i32
    %c0_i32_0 = arith.constant 0 : i32
    return %arg0, %c0_i32 : i32, i32
  }
  func.func @transform_1(%arg0: i32) -> (i32, i32) {
    %c0_i32 = arith.constant 0 : i32
    %c0_i32_0 = arith.constant 0 : i32
    %c0_i32_1 = arith.constant 0 : i32
    return %c0_i32, %c0_i32_0 : i32, i32
  }
  func.func @transform_2(%arg0: i32) -> (i32, i32) {
    %c0_i32 = arith.constant 0 : i32
    %c0_i32_0 = arith.constant 0 : i32
    %c0_i32_1 = arith.constant 0 : i32
    return %c0_i32, %c0_i32_0 : i32, i32
  }
  func.func @transform_3(%arg0: i32) -> (i32, i32) {
    %c0_i32 = arith.constant 0 : i32
    %c0_i32_0 = arith.constant 0 : i32
    %c0_i32_1 = arith.constant 0 : i32
    return %c0_i32, %c0_i32_0 : i32, i32
  }
  func.func @transform_4(%arg0: i32) -> (i32, i32) {
    %c0_i32 = arith.constant 0 : i32
    %c0_i32_0 = arith.constant 0 : i32
    %c0_i32_1 = arith.constant 0 : i32
    return %c0_i32, %c0_i32_0 : i32, i32
  }
  func.func @transform_5(%arg0: i32) -> (i32, i32) {
    %c0_i32 = arith.constant 0 : i32
    %c0_i32_0 = arith.constant 0 : i32
    %c0_i32_1 = arith.constant 0 : i32
    return %c0_i32, %c0_i32_0 : i32, i32
  }
  func.func @transform_6(%arg0: i32) -> (i32, i32) {
    %c0_i32 = arith.constant 0 : i32
    %c0_i32_0 = arith.constant 0 : i32
    %c0_i32_1 = arith.constant 0 : i32
    return %c0_i32, %c0_i32_0 : i32, i32
  }
  func.func @transform_7(%arg0: i32) -> (i32, i32) {
    %c0_i32 = arith.constant 0 : i32
    %c0_i32_0 = arith.constant 0 : i32
    return %arg0, %c0_i32 : i32, i32
  }
}

module attributes {stable_mosaic.version = 11 : i64} {
  func.func @kernel(%arg0: i32, %arg1: memref<128x128xbf16, #tpu.memory_space<vmem>>, %arg2: memref<128x128xbf16, #tpu.memory_space<vmem>>, %arg3: memref<1x128xf32, #tpu.memory_space<vmem>>, %arg4: memref<128x128xbf16, #tpu.memory_space<vmem>>, %arg5: memref<1x128xf32, #tpu.memory_space<vmem>>, %arg6: memref<128x128xbf16, #tpu.memory_space<vmem>>, %arg7: memref<1x128xf32, #tpu.memory_space<vmem>>, %arg8: memref<128x128xf32, #tpu.memory_space<vmem>>) attributes {dimension_semantics = [#tpu.dimension_semantics<parallel>], iteration_bounds = array<i64: 1>, scalar_prefetch = 0 : i64, scratch_operands = 0 : i64, tpu.core_type = #tpu.core_type<tc>, window_params = [{transform_indices = @transform_0, window_bounds = array<i64: 128, 128>}, {pipeline_mode = #tpu.pipeline_mode<synchronous>, transform_indices = @transform_1, window_bounds = array<i64: 128, 128>}, {pipeline_mode = #tpu.pipeline_mode<synchronous>, transform_indices = @transform_2, window_bounds = array<i64: 1, 128>}, {pipeline_mode = #tpu.pipeline_mode<synchronous>, transform_indices = @transform_3, window_bounds = array<i64: 128, 128>}, {pipeline_mode = #tpu.pipeline_mode<synchronous>, transform_indices = @transform_4, window_bounds = array<i64: 1, 128>}, {pipeline_mode = #tpu.pipeline_mode<synchronous>, transform_indices = @transform_5, window_bounds = array<i64: 128, 128>}, {pipeline_mode = #tpu.pipeline_mode<synchronous>, transform_indices = @transform_6, window_bounds = array<i64: 1, 128>}, {transform_indices = @transform_7, window_bounds = array<i64: 128, 128>}]} {
    %c0 = arith.constant 0 : index
    %c0_0 = arith.constant 0 : index
    %0 = vector.load %arg1[%c0, %c0_0] : memref<128x128xbf16, #tpu.memory_space<vmem>>, vector<128x128xbf16>
    %c0_1 = arith.constant 0 : index
    %c0_2 = arith.constant 0 : index
    %1 = vector.load %arg2[%c0_1, %c0_2] : memref<128x128xbf16, #tpu.memory_space<vmem>>, vector<128x128xbf16>
    %c0_3 = arith.constant 0 : index
    %c0_4 = arith.constant 0 : index
    %2 = vector.load %arg3[%c0_3, %c0_4] : memref<1x128xf32, #tpu.memory_space<vmem>>, vector<1x128xf32>
    %cst = arith.constant dense<0.000000e+00> : vector<128x128xf32>
    %3 = tpu.matmul %0, %1, %cst {dimension_numbers = #tpu.dot_dimension_numbers<[1], [0], [0], [1], [0, 0, 1, 1], [], []>} : vector<128x128xbf16>, vector<128x128xbf16>, vector<128x128xf32> -> vector<128x128xf32>
    %4 = vector.broadcast %2 : vector<1x128xf32> to vector<128x128xf32>
    %5 = arith.addf %3, %4 : vector<128x128xf32>
    %cst_5 = arith.constant 0.000000e+00 : f32
    %6 = vector.broadcast %cst_5 : f32 to vector<128x128xf32>
    %7 = arith.maximumf %5, %6 : vector<128x128xf32>
    %8 = arith.truncf %7 : vector<128x128xf32> to vector<128x128xbf16>
    %c0_6 = arith.constant 0 : index
    %c0_7 = arith.constant 0 : index
    %9 = vector.load %arg4[%c0_6, %c0_7] : memref<128x128xbf16, #tpu.memory_space<vmem>>, vector<128x128xbf16>
    %c0_8 = arith.constant 0 : index
    %c0_9 = arith.constant 0 : index
    %10 = vector.load %arg5[%c0_8, %c0_9] : memref<1x128xf32, #tpu.memory_space<vmem>>, vector<1x128xf32>
    %cst_10 = arith.constant dense<0.000000e+00> : vector<128x128xf32>
    %11 = tpu.matmul %8, %9, %cst_10 {dimension_numbers = #tpu.dot_dimension_numbers<[1], [0], [0], [1], [0, 0, 1, 1], [], []>} : vector<128x128xbf16>, vector<128x128xbf16>, vector<128x128xf32> -> vector<128x128xf32>
    %12 = vector.broadcast %10 : vector<1x128xf32> to vector<128x128xf32>
    %13 = arith.addf %11, %12 : vector<128x128xf32>
    %cst_11 = arith.constant 0.000000e+00 : f32
    %14 = vector.broadcast %cst_11 : f32 to vector<128x128xf32>
    %15 = arith.maximumf %13, %14 : vector<128x128xf32>
    %16 = arith.truncf %15 : vector<128x128xf32> to vector<128x128xbf16>
    %c0_12 = arith.constant 0 : index
    %c0_13 = arith.constant 0 : index
    %17 = vector.load %arg6[%c0_12, %c0_13] : memref<128x128xbf16, #tpu.memory_space<vmem>>, vector<128x128xbf16>
    %c0_14 = arith.constant 0 : index
    %c0_15 = arith.constant 0 : index
    %18 = vector.load %arg7[%c0_14, %c0_15] : memref<1x128xf32, #tpu.memory_space<vmem>>, vector<1x128xf32>
    %cst_16 = arith.constant dense<0.000000e+00> : vector<128x128xf32>
    %19 = tpu.matmul %16, %17, %cst_16 {dimension_numbers = #tpu.dot_dimension_numbers<[1], [0], [0], [1], [0, 0, 1, 1], [], []>} : vector<128x128xbf16>, vector<128x128xbf16>, vector<128x128xf32> -> vector<128x128xf32>
    %20 = vector.broadcast %18 : vector<1x128xf32> to vector<128x128xf32>
    %21 = arith.addf %19, %20 : vector<128x128xf32>
    %cst_17 = arith.constant 0.000000e+00 : f32
    %22 = vector.broadcast %cst_17 : f32 to vector<128x128xf32>
    %23 = arith.subf %22, %21 : vector<128x128xf32>
    %24 = math.exp %23 : vector<128x128xf32>
    %cst_18 = arith.constant 1.000000e+00 : f32
    %25 = vector.broadcast %cst_18 : f32 to vector<128x128xf32>
    %26 = arith.addf %25, %24 : vector<128x128xf32>
    %27 = tpu.reciprocal %26 {approx = true} : vector<128x128xf32> -> vector<128x128xf32>
    %c0_19 = arith.constant 0 : index
    %c0_20 = arith.constant 0 : index
    %28 = vector.load %arg8[%c0_19, %c0_20] : memref<128x128xf32, #tpu.memory_space<vmem>>, vector<128x128xf32>
    tpu.vector_store %arg8[%c0_19, %c0_20], %27 {strides = array<i32>} : memref<128x128xf32, #tpu.memory_space<vmem>>, vector<128x128xf32>,
    return
  }
  func.func @transform_0(%arg0: i32) -> (i32, i32) {
    %c0_i32 = arith.constant 0 : i32
    %c0_i32_0 = arith.constant 0 : i32
    return %arg0, %c0_i32 : i32, i32
  }
  func.func @transform_1(%arg0: i32) -> (i32, i32) {
    %c0_i32 = arith.constant 0 : i32
    %c0_i32_0 = arith.constant 0 : i32
    %c0_i32_1 = arith.constant 0 : i32
    return %c0_i32, %c0_i32_0 : i32, i32
  }
  func.func @transform_2(%arg0: i32) -> (i32, i32) {
    %c0_i32 = arith.constant 0 : i32
    %c0_i32_0 = arith.constant 0 : i32
    %c0_i32_1 = arith.constant 0 : i32
    return %c0_i32, %c0_i32_0 : i32, i32
  }
  func.func @transform_3(%arg0: i32) -> (i32, i32) {
    %c0_i32 = arith.constant 0 : i32
    %c0_i32_0 = arith.constant 0 : i32
    %c0_i32_1 = arith.constant 0 : i32
    return %c0_i32, %c0_i32_0 : i32, i32
  }
  func.func @transform_4(%arg0: i32) -> (i32, i32) {
    %c0_i32 = arith.constant 0 : i32
    %c0_i32_0 = arith.constant 0 : i32
    %c0_i32_1 = arith.constant 0 : i32
    return %c0_i32, %c0_i32_0 : i32, i32
  }
  func.func @transform_5(%arg0: i32) -> (i32, i32) {
    %c0_i32 = arith.constant 0 : i32
    %c0_i32_0 = arith.constant 0 : i32
    %c0_i32_1 = arith.constant 0 : i32
    return %c0_i32, %c0_i32_0 : i32, i32
  }
  func.func @transform_6(%arg0: i32) -> (i32, i32) {
    %c0_i32 = arith.constant 0 : i32
    %c0_i32_0 = arith.constant 0 : i32
    %c0_i32_1 = arith.constant 0 : i32
    return %c0_i32, %c0_i32_0 : i32, i32
  }
  func.func @transform_7(%arg0: i32) -> (i32, i32) {
    %c0_i32 = arith.constant 0 : i32
    %c0_i32_0 = arith.constant 0 : i32
    return %arg0, %c0_i32 : i32, i32
  }
}

</mosaic_0001>

<llo_original>
// kernel: tpu_custom_call.1
$region0: #{tpu_custom_call.1}
  #allocation0 [shape = 'u32[]', space=smem, size = 0x4, offset = 0x4, fixed_abs, tag = 'smem constant byte address 0x4 - core index']
  #allocation1 [shape = 'u32[144,128]{1,0:T(1,128)}', space=vmem, size = 0x12000, scoped, tag = 'internal scratch']
  %s0 = inlined_call_operand.hbm [shape: bf16[128,128], index: 0, kind: input, shape index: {}]
  %s1 = inlined_call_operand.hbm [shape: bf16[128,128], index: 1, kind: input, shape index: {}]
  %s2 = inlined_call_operand.vmem [shape: f32[1,128], index: 2, kind: input, shape index: {}]
  %s3 = inlined_call_operand.hbm [shape: bf16[128,128], index: 3, kind: input, shape index: {}]
  %s4 = inlined_call_operand.vmem [shape: f32[1,128], index: 4, kind: input, shape index: {}]
  %s5 = inlined_call_operand.hbm [shape: bf16[128,128], index: 5, kind: input, shape index: {}]
  %s6 = inlined_call_operand.vmem [shape: f32[1,128], index: 6, kind: input, shape index: {}]
  %s7 = inlined_call_operand.hbm [shape: f32[128,128], index: 7, kind: output, shape index: {}]
  %s8 = sld [smem:[#allocation0]]
  $region54: #{tpu_custom_call.1} parent=0
    _
  %s10 = ssub.s32 1, %s8
  %s11 = scalar_select 0, %s10, %s8
  $region1: #{tpu_custom_call.1} parent=0
    #allocation2 [shape = 'u8[32768]{0}', space=vmem, size = 0x8000, scoped, tag = 'input window, operand 0, single buffered']
    #allocation3 [shape = 's32[1]{0}', space=sflag, size = 0x4, scoped, tag = 'scoped memory for tpu_custom_call.1']
    #allocation4 [shape = 's32[1]{0}', space=sflag, size = 0x4, scoped, tag = 'scoped memory for tpu_custom_call.1']
    #allocation5 [shape = 'u8[32768]{0}', space=vmem, size = 0x8000, scoped, tag = 'input window, operand 1, single buffered']
    #allocation6 [shape = 's32[1]{0}', space=sflag, size = 0x4, scoped, tag = 'scoped memory for tpu_custom_call.1']
    #allocation7 [shape = 'u8[32768]{0}', space=vmem, size = 0x8000, scoped, tag = 'input window, operand 3, single buffered']
    #allocation8 [shape = 'u8[32768]{0}', space=vmem, size = 0x8000, scoped, tag = 'input window, operand 5, single buffered']
    #allocation9 [shape = 's32[1]{0}', space=sflag, size = 0x4, scoped, tag = 'scoped memory for tpu_custom_call.1']
    #allocation10 [shape = 'u8[65536]{0}', space=vmem, size = 0x10000, scoped, tag = 'output window, operand 0, single buffered']
    %12 = vsyncpa [#allocation3], 0
    %13 = vsyncpa [#allocation6], 0
    %14 = vsyncpa [#allocation9], 0
    %15 = vsyncpa [#allocation4], 0
    // Predicated region
    $region2: #{tpu_custom_call.1} parent=1 // pred_check
      _
    $region3: #{tpu_custom_call.1} parent=1 // pred_check_branch
      %17 = sbr.rel (0) target = $region5
    $region4: #{tpu_custom_call.1} parent=1 // pred_region
      %s19 = ssub.s32 1024, 1024
      %20 = vsyncadd [#allocation3], %s19
      %s21 = sshll.u32 [#allocation2], 4
      %s22 = int_to_ptr.vmem [resolvable:$true] %s21
      %27 = dma.hbm_to_vmem [thread:$0]  %s0, 1024, %s22, [#allocation3], 64, 64, 4
    $region5: #{tpu_custom_call.1} parent=1 // pred_fallthru
      _
    // Predicated region
    $region6: #{tpu_custom_call.1} parent=1 // pred_check
      _
    $region7: #{tpu_custom_call.1} parent=1 // pred_check_branch
      %29 = sbr.rel (0) target = $region9
    $region8: #{tpu_custom_call.1} parent=1 // pred_region
      %s31 = ssub.s32 1024, 1024
      %32 = vsyncadd [#allocation6], %s31
      %s33 = sshll.u32 [#allocation5], 4
      %s34 = int_to_ptr.vmem [resolvable:$true] %s33
      %39 = dma.hbm_to_vmem [thread:$0]  %s1, 1024, %s34, [#allocation6], 64, 64, 4
    $region9: #{tpu_custom_call.1} parent=1 // pred_fallthru
      _
    // Predicated region
    $region10: #{tpu_custom_call.1} parent=1 // pred_check
      _
    $region11: #{tpu_custom_call.1} parent=1 // pred_check_branch
      %41 = sbr.rel (0) target = $region13
    $region12: #{tpu_custom_call.1} parent=1 // pred_region
      _
    $region13: #{tpu_custom_call.1} parent=1 // pred_fallthru
      _
    // Predicated region
    $region14: #{tpu_custom_call.1} parent=1 // pred_check
      _
    $region15: #{tpu_custom_call.1} parent=1 // pred_check_branch
      %43 = sbr.rel (0) target = $region17
    $region16: #{tpu_custom_call.1} parent=1 // pred_region
      %s45 = ssub.s32 1024, 1024
      %46 = vsyncadd [#allocation6], %s45
      %s47 = sshll.u32 [#allocation7], 4
      %s48 = int_to_ptr.vmem [resolvable:$true] %s47
      %53 = dma.hbm_to_vmem [thread:$0]  %s3, 1024, %s48, [#allocation6], 64, 64, 4
    $region17: #{tpu_custom_call.1} parent=1 // pred_fallthru
      _
    // Predicated region
    $region18: #{tpu_custom_call.1} parent=1 // pred_check
      _
    $region19: #{tpu_custom_call.1} parent=1 // pred_check_branch
      %55 = sbr.rel (0) target = $region21
    $region20: #{tpu_custom_call.1} parent=1 // pred_region
      _
    $region21: #{tpu_custom_call.1} parent=1 // pred_fallthru
      _
    // Predicated region
    $region22: #{tpu_custom_call.1} parent=1 // pred_check
      _
    $region23: #{tpu_custom_call.1} parent=1 // pred_check_branch
      %57 = sbr.rel (0) target = $region25
    $region24: #{tpu_custom_call.1} parent=1 // pred_region
      %s59 = ssub.s32 1024, 1024
      %60 = vsyncadd [#allocation9], %s59
      %s61 = sshll.u32 [#allocation8], 4
      %s62 = int_to_ptr.vmem [resolvable:$true] %s61
      %67 = dma.hbm_to_vmem [thread:$0]  %s5, 1024, %s62, [#allocation9], 64, 64, 4
    $region25: #{tpu_custom_call.1} parent=1 // pred_fallthru
      _
    // Predicated region
    $region26: #{tpu_custom_call.1} parent=1 // pred_check
      _
    $region27: #{tpu_custom_call.1} parent=1 // pred_check_branch
      %69 = sbr.rel (0) target = $region29
    $region28: #{tpu_custom_call.1} parent=1 // pred_region
      _
    $region29: #{tpu_custom_call.1} parent=1 // pred_fallthru
      _
    // Predicated region
    $region30: #{tpu_custom_call.1} parent=1 // pred_check
      _
    $region31: #{tpu_custom_call.1} parent=1 // pred_check_branch
      %71 = sbr.rel (0) target = $region33
    $region32: #{tpu_custom_call.1} parent=1 // pred_region
      %72 = dma.done [#allocation3], 1024
    $region33: #{tpu_custom_call.1} parent=1 // pred_fallthru
      _
    // Predicated region
    $region34: #{tpu_custom_call.1} parent=1 // pred_check
      _
    $region35: #{tpu_custom_call.1} parent=1 // pred_check_branch
      %74 = sbr.rel (0) target = $region37
    $region36: #{tpu_custom_call.1} parent=1 // pred_region
      %75 = dma.done [#allocation6], 1024
    $region37: #{tpu_custom_call.1} parent=1 // pred_fallthru
      _
    // Predicated region
    $region38: #{tpu_custom_call.1} parent=1 // pred_check
      _
    $region39: #{tpu_custom_call.1} parent=1 // pred_check_branch
      %77 = sbr.rel (0) target = $region41
    $region40: #{tpu_custom_call.1} parent=1 // pred_region
      %78 = dma.done [#allocation6], 1024
    $region41: #{tpu_custom_call.1} parent=1 // pred_fallthru
      _
    // Predicated region
    $region42: #{tpu_custom_call.1} parent=1 // pred_check
      _
    $region43: #{tpu_custom_call.1} parent=1 // pred_check_branch
      %80 = sbr.rel (0) target = $region45
    $region44: #{tpu_custom_call.1} parent=1 // pred_region
      %81 = dma.done [#allocation9], 1024
    $region45: #{tpu_custom_call.1} parent=1 // pred_fallthru
      _
    %v83 = vld [vmem:[#allocation2] sm:$0xf]
    %v84 = vld [vmem:[#allocation2 + $0x4] sm:$0xf]
    %v85 = vld [vmem:[#allocation2 + $0x8] sm:$0xf]
    %v86 = vld [vmem:[#allocation2 + $0xc] sm:$0xf]
    %v87 = vld [vmem:[#allocation2 + $0x10] sm:$0xf]
    %v88 = vld [vmem:[#allocation2 + $0x14] sm:$0xf]
    %v89 = vld [vmem:[#allocation2 + $0x18] sm:$0xf]
    %v90 = vld [vmem:[#allocation2 + $0x1c] sm:$0xf]
    %v91 = vld [vmem:[#allocation2 + $0x20] sm:$0xf]
    %v92 = vld [vmem:[#allocation2 + $0x24] sm:$0xf]
    %v93 = vld [vmem:[#allocation2 + $0x28] sm:$0xf]
    %v94 = vld [vmem:[#allocation2 + $0x2c] sm:$0xf]
    %v95 = vld [vmem:[#allocation2 + $0x30] sm:$0xf]
    %v96 = vld [vmem:[#allocation2 + $0x34] sm:$0xf]
    %v97 = vld [vmem:[#allocation2 + $0x38] sm:$0xf]
    %v98 = vld [vmem:[#allocation2 + $0x3c] sm:$0xf]
    %v99 = vld [vmem:[#allocation5] sm:$0xf]
    %v100 = vld [vmem:[#allocation5 + $0x4] sm:$0xf]
    %v101 = vld [vmem:[#allocation5 + $0x8] sm:$0xf]
    %v102 = vld [vmem:[#allocation5 + $0xc] sm:$0xf]
    %v103 = vld [vmem:[#allocation5 + $0x10] sm:$0xf]
    %v104 = vld [vmem:[#allocation5 + $0x14] sm:$0xf]
    %v105 = vld [vmem:[#allocation5 + $0x18] sm:$0xf]
    %v106 = vld [vmem:[#allocation5 + $0x1c] sm:$0xf]
    %v107 = vld [vmem:[#allocation5 + $0x20] sm:$0xf]
    %v108 = vld [vmem:[#allocation5 + $0x24] sm:$0xf]
    %v109 = vld [vmem:[#allocation5 + $0x28] sm:$0xf]
    %v110 = vld [vmem:[#allocation5 + $0x2c] sm:$0xf]
    %v111 = vld [vmem:[#allocation5 + $0x30] sm:$0xf]
    %v112 = vld [vmem:[#allocation5 + $0x34] sm:$0xf]
    %v113 = vld [vmem:[#allocation5 + $0x38] sm:$0xf]
    %v114 = vld [vmem:[#allocation5 + $0x3c] sm:$0xf]
    %v115 = vld [vmem:[%s2] sm:$0x1]
    %v117 = vlaneseq
    %v118 = vshrl.u32 %v117, 7
    %v119 = vsub.s32 0, %v118
    %v120 = vrot.slane %v115, %v119
    %v138 = vunpack.c.l.b16 %v83
    %v139 = vunpack.c.l.b16 %v84
    %v140 = vunpack.c.l.b16 %v85
    %v141 = vunpack.c.l.b16 %v86
    %v142 = vunpack.c.l.b16 %v87
    %v143 = vunpack.c.l.b16 %v88
    %v144 = vunpack.c.l.b16 %v89
    %v145 = vunpack.c.l.b16 %v90
    %v146 = vunpack.c.l.b16 %v91
    %v147 = vunpack.c.l.b16 %v92
    %v148 = vunpack.c.l.b16 %v93
    %v149 = vunpack.c.l.b16 %v94
    %v150 = vunpack.c.l.b16 %v95
    %v151 = vunpack.c.l.b16 %v96
    %v152 = vunpack.c.l.b16 %v97
    %v153 = vunpack.c.l.b16 %v98
    %v154 = vpack.c.b16 %v139, %v138
    %v155 = vpack.c.b16 %v141, %v140
    %v156 = vpack.c.b16 %v143, %v142
    %v157 = vpack.c.b16 %v145, %v144
    %v158 = vpack.c.b16 %v147, %v146
    %v159 = vpack.c.b16 %v149, %v148
    %v160 = vpack.c.b16 %v151, %v150
    %v161 = vpack.c.b16 %v153, %v152
    %v186 = vunpack.c.l.b16 %v99
    %v187 = vunpack.c.l.b16 %v100
    %v188 = vunpack.c.l.b16 %v101
    %v189 = vunpack.c.l.b16 %v102
    %v190 = vunpack.c.l.b16 %v103
    %v191 = vunpack.c.l.b16 %v104
    %v192 = vunpack.c.l.b16 %v105
    %v193 = vunpack.c.l.b16 %v106
    %v194 = vunpack.c.l.b16 %v107
    %v195 = vunpack.c.l.b16 %v108
    %v196 = vunpack.c.l.b16 %v109
    %v197 = vunpack.c.l.b16 %v110
    %v198 = vunpack.c.l.b16 %v111
    %v199 = vunpack.c.l.b16 %v112
    %v200 = vunpack.c.l.b16 %v113
    %v201 = vunpack.c.l.b16 %v114
    %v202 = vpack.c.b16 %v187, %v186
    %v203 = vpack.c.b16 %v189, %v188
    %v204 = vpack.c.b16 %v191, %v190
    %v205 = vpack.c.b16 %v193, %v192
    %v206 = vpack.c.b16 %v195, %v194
    %v207 = vpack.c.b16 %v197, %v196
    %v208 = vpack.c.b16 %v199, %v198
    %v209 = vpack.c.b16 %v201, %v200
    %218 = vmatprep.subr.bf16.mxu0 0
    %219 = vmatpush1.bf16.msra.mxu0 %v202
    %220 = vmatprep.subr.bf16.mxu0 0
    %221 = vmatpush1.bf16.msra.mxu0 %v203
    %222 = vmatprep.subr.bf16.mxu0 0
    %223 = vmatpush1.bf16.msra.mxu0 %v204
    %224 = vmatprep.subr.bf16.mxu0 0
    %225 = vmatpush1.bf16.msra.mxu0 %v205
    %226 = vmatprep.subr.bf16.mxu0 0
    %227 = vmatpush1.bf16.msra.mxu0 %v206
    %228 = vmatprep.subr.bf16.mxu0 0
    %229 = vmatpush1.bf16.msra.mxu0 %v207
    %230 = vmatprep.subr.bf16.mxu0 0
    %231 = vmatpush1.bf16.msra.mxu0 %v208
    %232 = vmatprep.subr.bf16.mxu0 0
    %233 = vmatpush1.bf16.msra.mxu0 %v209
    %234 = vmatprep.subr.bf16.mxu0 0
    %235 = vmatpush1.bf16.msra.mxu0 0
    %236 = vmatprep.subr.bf16.mxu0 0
    %237 = vmatpush1.bf16.msra.mxu0 0
    %238 = vmatprep.subr.bf16.mxu0 0
    %239 = vmatpush1.bf16.msra.mxu0 0
    %240 = vmatprep.subr.bf16.mxu0 0
    %241 = vmatpush1.bf16.msra.mxu0 0
    %242 = vmatprep.subr.bf16.mxu0 0
    %243 = vmatpush1.bf16.msra.mxu0 0
    %244 = vmatprep.subr.bf16.mxu0 0
    %245 = vmatpush1.bf16.msra.mxu0 0
    %246 = vmatprep.subr.bf16.mxu0 0
    %247 = vmatpush1.bf16.msra.mxu0 0
    %248 = vmatprep.subr.bf16.mxu0 0
    %249 = vmatpush1.bf16.msra.mxu0 0
    %250 = vmatprep.mubr.bf16.mxu0 0
    %251 = vmatmul.mubr.bf16.gmra.mrb[0].mxu0 %v154
    %v252 = vpop.f32.mrb[0].mxu0
    %v253 = vadd.f32 %v120, %v252
    %v254 = vpop.f32.mrb[0].mxu0
    %v255 = vpop.f32.mrb[0].mxu0
    %v256 = vadd.f32 %v120, %v255
    %v257 = vpop.f32.mrb[0].mxu0
    %258 = vmatprep.mubr.bf16.mxu0 0
    %259 = vmatmul.mubr.bf16.gmra.mrb[0].mxu0 %v155
    %v260 = vpop.f32.mrb[0].mxu0
    %v261 = vadd.f32 %v120, %v260
    %v262 = vpop.f32.mrb[0].mxu0
    %v263 = vpop.f32.mrb[0].mxu0
    %v264 = vadd.f32 %v120, %v263
    %v265 = vpop.f32.mrb[0].mxu0
    %266 = vmatprep.mubr.bf16.mxu0 0
    %267 = vmatmul.mubr.bf16.gmra.mrb[0].mxu0 %v156
    %v268 = vpop.f32.mrb[0].mxu0
    %v269 = vadd.f32 %v120, %v268
    %v270 = vpop.f32.mrb[0].mxu0
    %v271 = vpop.f32.mrb[0].mxu0
    %v272 = vadd.f32 %v120, %v271
    %v273 = vpop.f32.mrb[0].mxu0
    %274 = vmatprep.mubr.bf16.mxu0 0
    %275 = vmatmul.mubr.bf16.gmra.mrb[0].mxu0 %v157
    %v276 = vpop.f32.mrb[0].mxu0
    %v277 = vadd.f32 %v120, %v276
    %v278 = vpop.f32.mrb[0].mxu0
    %v279 = vpop.f32.mrb[0].mxu0
    %v280 = vadd.f32 %v120, %v279
    %v281 = vpop.f32.mrb[0].mxu0
    %282 = vmatprep.mubr.bf16.mxu0 0
    %283 = vmatmul.mubr.bf16.gmra.mrb[0].mxu0 %v158
    %v284 = vpop.f32.mrb[0].mxu0
    %v285 = vadd.f32 %v120, %v284
    %v286 = vpop.f32.mrb[0].mxu0
    %v287 = vpop.f32.mrb[0].mxu0
    %v288 = vadd.f32 %v120, %v287
    %v289 = vpop.f32.mrb[0].mxu0
    %290 = vmatprep.mubr.bf16.mxu0 0
    %291 = vmatmul.mubr.bf16.gmra.mrb[0].mxu0 %v159
    %v292 = vpop.f32.mrb[0].mxu0
    %v293 = vadd.f32 %v120, %v292
    %v294 = vpop.f32.mrb[0].mxu0
    %v295 = vpop.f32.mrb[0].mxu0
    %v296 = vadd.f32 %v120, %v295
    %v297 = vpop.f32.mrb[0].mxu0
    %298 = vmatprep.mubr.bf16.mxu0 0
    %299 = vmatmul.mubr.bf16.gmra.mrb[0].mxu0 %v160
    %v300 = vpop.f32.mrb[0].mxu0
    %v301 = vadd.f32 %v120, %v300
    %v302 = vpop.f32.mrb[0].mxu0
    %v303 = vpop.f32.mrb[0].mxu0
    %v304 = vadd.f32 %v120, %v303
    %v305 = vpop.f32.mrb[0].mxu0
    %306 = vmatprep.mubr.bf16.mxu0 0
    %307 = vmatmul.mubr.bf16.gmra.mrb[0].mxu0 %v161
    %v308 = vpop.f32.mrb[0].mxu0
    %v309 = vadd.f32 %v120, %v308
    %v310 = vpop.f32.mrb[0].mxu0
    %v311 = vpop.f32.mrb[0].mxu0
    %v312 = vadd.f32 %v120, %v311
    %v313 = vpop.f32.mrb[0].mxu0
    %314 = vdwg.mxu0
    %v315 = vmax.f32 %v253, 0.0
    %v316 = vmax.f32 %v256, 0.0
    %v317 = vmax.f32 %v261, 0.0
    %v318 = vmax.f32 %v264, 0.0
    %v319 = vmax.f32 %v269, 0.0
    %v320 = vmax.f32 %v272, 0.0
    %v321 = vmax.f32 %v277, 0.0
    %v322 = vmax.f32 %v280, 0.0
    %v323 = vmax.f32 %v285, 0.0
    %v324 = vmax.f32 %v288, 0.0
    %v325 = vmax.f32 %v293, 0.0
    %v326 = vmax.f32 %v296, 0.0
    %v327 = vmax.f32 %v301, 0.0
    %v328 = vmax.f32 %v304, 0.0
    %v329 = vmax.f32 %v309, 0.0
    %v330 = vmax.f32 %v312, 0.0
    %v331 = vpack.c.bf16 %v316, %v315
    %v332 = vpack.c.bf16 %v318, %v317
    %v333 = vpack.c.bf16 %v320, %v319
    %v334 = vpack.c.bf16 %v322, %v321
    %v335 = vpack.c.bf16 %v324, %v323
    %v336 = vpack.c.bf16 %v326, %v325
    %v337 = vpack.c.bf16 %v328, %v327
    %v338 = vpack.c.bf16 %v330, %v329
    %v339 = vld [vmem:[#allocation7] sm:$0xf]
    %v340 = vld [vmem:[#allocation7 + $0x4] sm:$0xf]
    %v341 = vld [vmem:[#allocation7 + $0x8] sm:$0xf]
    %v342 = vld [vmem:[#allocation7 + $0xc] sm:$0xf]
    %v343 = vld [vmem:[#allocation7 + $0x10] sm:$0xf]
    %v344 = vld [vmem:[#allocation7 + $0x14] sm:$0xf]
    %v345 = vld [vmem:[#allocation7 + $0x18] sm:$0xf]
    %v346 = vld [vmem:[#allocation7 + $0x1c] sm:$0xf]
    %v347 = vld [vmem:[#allocation7 + $0x20] sm:$0xf]
    %v348 = vld [vmem:[#allocation7 + $0x24] sm:$0xf]
    %v349 = vld [vmem:[#allocation7 + $0x28] sm:$0xf]
    %v350 = vld [vmem:[#allocation7 + $0x2c] sm:$0xf]
    %v351 = vld [vmem:[#allocation7 + $0x30] sm:$0xf]
    %v352 = vld [vmem:[#allocation7 + $0x34] sm:$0xf]
    %v353 = vld [vmem:[#allocation7 + $0x38] sm:$0xf]
    %v354 = vld [vmem:[#allocation7 + $0x3c] sm:$0xf]
    %v355 = vld [vmem:[%s4] sm:$0x1]
    %v357 = vlaneseq
    %v358 = vshrl.u32 %v357, 7
    %v359 = vsub.s32 0, %v358
    %v360 = vrot.slane %v355, %v359
    %v378 = vunpack.c.l.b16 %v339
    %v379 = vunpack.c.l.b16 %v340
    %v380 = vunpack.c.l.b16 %v341
    %v381 = vunpack.c.l.b16 %v342
    %v382 = vunpack.c.l.b16 %v343
    %v383 = vunpack.c.l.b16 %v344
    %v384 = vunpack.c.l.b16 %v345
    %v385 = vunpack.c.l.b16 %v346
    %v386 = vunpack.c.l.b16 %v347
    %v387 = vunpack.c.l.b16 %v348
    %v388 = vunpack.c.l.b16 %v349
    %v389 = vunpack.c.l.b16 %v350
    %v390 = vunpack.c.l.b16 %v351
    %v391 = vunpack.c.l.b16 %v352
    %v392 = vunpack.c.l.b16 %v353
    %v393 = vunpack.c.l.b16 %v354
    %v394 = vpack.c.b16 %v379, %v378
    %v395 = vpack.c.b16 %v381, %v380
    %v396 = vpack.c.b16 %v383, %v382
    %v397 = vpack.c.b16 %v385, %v384
    %v398 = vpack.c.b16 %v387, %v386
    %v399 = vpack.c.b16 %v389, %v388
    %v400 = vpack.c.b16 %v391, %v390
    %v401 = vpack.c.b16 %v393, %v392
    %410 = vmatprep.subr.bf16.mxu0 0
    %411 = vmatpush1.bf16.msra.mxu0 %v394
    %412 = vmatprep.subr.bf16.mxu0 0
    %413 = vmatpush1.bf16.msra.mxu0 %v395
    %414 = vmatprep.subr.bf16.mxu0 0
    %415 = vmatpush1.bf16.msra.mxu0 %v396
    %416 = vmatprep.subr.bf16.mxu0 0
    %417 = vmatpush1.bf16.msra.mxu0 %v397
    %418 = vmatprep.subr.bf16.mxu0 0
    %419 = vmatpush1.bf16.msra.mxu0 %v398
    %420 = vmatprep.subr.bf16.mxu0 0
    %421 = vmatpush1.bf16.msra.mxu0 %v399
    %422 = vmatprep.subr.bf16.mxu0 0
    %423 = vmatpush1.bf16.msra.mxu0 %v400
    %424 = vmatprep.subr.bf16.mxu0 0
    %425 = vmatpush1.bf16.msra.mxu0 %v401
    %426 = vmatprep.subr.bf16.mxu0 0
    %427 = vmatpush1.bf16.msra.mxu0 0
    %428 = vmatprep.subr.bf16.mxu0 0
    %429 = vmatpush1.bf16.msra.mxu0 0
    %430 = vmatprep.subr.bf16.mxu0 0
    %431 = vmatpush1.bf16.msra.mxu0 0
    %432 = vmatprep.subr.bf16.mxu0 0
    %433 = vmatpush1.bf16.msra.mxu0 0
    %434 = vmatprep.subr.bf16.mxu0 0
    %435 = vmatpush1.bf16.msra.mxu0 0
    %436 = vmatprep.subr.bf16.mxu0 0
    %437 = vmatpush1.bf16.msra.mxu0 0
    %438 = vmatprep.subr.bf16.mxu0 0
    %439 = vmatpush1.bf16.msra.mxu0 0
    %440 = vmatprep.subr.bf16.mxu0 0
    %441 = vmatpush1.bf16.msra.mxu0 0
    %442 = vmatprep.mubr.bf16.mxu0 0
    %443 = vmatmul.mubr.bf16.gmra.mrb[0].mxu0 %v331
    %v444 = vpop.f32.mrb[0].mxu0
    %v445 = vadd.f32 %v360, %v444
    %v446 = vpop.f32.mrb[0].mxu0
    %v447 = vpop.f32.mrb[0].mxu0
    %v448 = vadd.f32 %v360, %v447
    %v449 = vpop.f32.mrb[0].mxu0
    %450 = vmatprep.mubr.bf16.mxu0 0
    %451 = vmatmul.mubr.bf16.gmra.mrb[0].mxu0 %v332
    %v452 = vpop.f32.mrb[0].mxu0
    %v453 = vadd.f32 %v360, %v452
    %v454 = vpop.f32.mrb[0].mxu0
    %v455 = vpop.f32.mrb[0].mxu0
    %v456 = vadd.f32 %v360, %v455
    %v457 = vpop.f32.mrb[0].mxu0
    %458 = vmatprep.mubr.bf16.mxu0 0
    %459 = vmatmul.mubr.bf16.gmra.mrb[0].mxu0 %v333
    %v460 = vpop.f32.mrb[0].mxu0
    %v461 = vadd.f32 %v360, %v460
    %v462 = vpop.f32.mrb[0].mxu0
    %v463 = vpop.f32.mrb[0].mxu0
    %v464 = vadd.f32 %v360, %v463
    %v465 = vpop.f32.mrb[0].mxu0
    %466 = vmatprep.mubr.bf16.mxu0 0
    %467 = vmatmul.mubr.bf16.gmra.mrb[0].mxu0 %v334
    %v468 = vpop.f32.mrb[0].mxu0
    %v469 = vadd.f32 %v360, %v468
    %v470 = vpop.f32.mrb[0].mxu0
    %v471 = vpop.f32.mrb[0].mxu0
    %v472 = vadd.f32 %v360, %v471
    %v473 = vpop.f32.mrb[0].mxu0
    %474 = vmatprep.mubr.bf16.mxu0 0
    %475 = vmatmul.mubr.bf16.gmra.mrb[0].mxu0 %v335
    %v476 = vpop.f32.mrb[0].mxu0
    %v477 = vadd.f32 %v360, %v476
    %v478 = vpop.f32.mrb[0].mxu0
    %v479 = vpop.f32.mrb[0].mxu0
    %v480 = vadd.f32 %v360, %v479
    %v481 = vpop.f32.mrb[0].mxu0
    %482 = vmatprep.mubr.bf16.mxu0 0
    %483 = vmatmul.mubr.bf16.gmra.mrb[0].mxu0 %v336
    %v484 = vpop.f32.mrb[0].mxu0
    %v485 = vadd.f32 %v360, %v484
    %v486 = vpop.f32.mrb[0].mxu0
    %v487 = vpop.f32.mrb[0].mxu0
    %v488 = vadd.f32 %v360, %v487
    %v489 = vpop.f32.mrb[0].mxu0
    %490 = vmatprep.mubr.bf16.mxu0 0
    %491 = vmatmul.mubr.bf16.gmra.mrb[0].mxu0 %v337
    %v492 = vpop.f32.mrb[0].mxu0
    %v493 = vadd.f32 %v360, %v492
    %v494 = vpop.f32.mrb[0].mxu0
    %v495 = vpop.f32.mrb[0].mxu0
    %v496 = vadd.f32 %v360, %v495
    %v497 = vpop.f32.mrb[0].mxu0
    %498 = vmatprep.mubr.bf16.mxu0 0
    %499 = vmatmul.mubr.bf16.gmra.mrb[0].mxu0 %v338
    %v500 = vpop.f32.mrb[0].mxu0
    %v501 = vadd.f32 %v360, %v500
    %v502 = vpop.f32.mrb[0].mxu0
    %v503 = vpop.f32.mrb[0].mxu0
    %v504 = vadd.f32 %v360, %v503
    %v505 = vpop.f32.mrb[0].mxu0
    %506 = vdwg.mxu0
    %v507 = vmax.f32 %v445, 0.0
    %v508 = vmax.f32 %v448, 0.0
    %v509 = vmax.f32 %v453, 0.0
    %v510 = vmax.f32 %v456, 0.0
    %v511 = vmax.f32 %v461, 0.0
    %v512 = vmax.f32 %v464, 0.0
    %v513 = vmax.f32 %v469, 0.0
    %v514 = vmax.f32 %v472, 0.0
    %v515 = vmax.f32 %v477, 0.0
    %v516 = vmax.f32 %v480, 0.0
    %v517 = vmax.f32 %v485, 0.0
    %v518 = vmax.f32 %v488, 0.0
    %v519 = vmax.f32 %v493, 0.0
    %v520 = vmax.f32 %v496, 0.0
    %v521 = vmax.f32 %v501, 0.0
    %v522 = vmax.f32 %v504, 0.0
    %v523 = vpack.c.bf16 %v508, %v507
    %v524 = vpack.c.bf16 %v510, %v509
    %v525 = vpack.c.bf16 %v512, %v511
    %v526 = vpack.c.bf16 %v514, %v513
    %v527 = vpack.c.bf16 %v516, %v515
    %v528 = vpack.c.bf16 %v518, %v517
    %v529 = vpack.c.bf16 %v520, %v519
    %v530 = vpack.c.bf16 %v522, %v521
    %v531 = vld [vmem:[#allocation8] sm:$0xf]
    %v532 = vld [vmem:[#allocation8 + $0x4] sm:$0xf]
    %v533 = vld [vmem:[#allocation8 + $0x8] sm:$0xf]
    %v534 = vld [vmem:[#allocation8 + $0xc] sm:$0xf]
    %v535 = vld [vmem:[#allocation8 + $0x10] sm:$0xf]
    %v536 = vld [vmem:[#allocation8 + $0x14] sm:$0xf]
    %v537 = vld [vmem:[#allocation8 + $0x18] sm:$0xf]
    %v538 = vld [vmem:[#allocation8 + $0x1c] sm:$0xf]
    %v539 = vld [vmem:[#allocation8 + $0x20] sm:$0xf]
    %v540 = vld [vmem:[#allocation8 + $0x24] sm:$0xf]
    %v541 = vld [vmem:[#allocation8 + $0x28] sm:$0xf]
    %v542 = vld [vmem:[#allocation8 + $0x2c] sm:$0xf]
    %v543 = vld [vmem:[#allocation8 + $0x30] sm:$0xf]
    %v544 = vld [vmem:[#allocation8 + $0x34] sm:$0xf]
    %v545 = vld [vmem:[#allocation8 + $0x38] sm:$0xf]
    %v546 = vld [vmem:[#allocation8 + $0x3c] sm:$0xf]
    %v547 = vld [vmem:[%s6] sm:$0x1]
    %v549 = vlaneseq
    %v550 = vshrl.u32 %v549, 7
    %v551 = vsub.s32 0, %v550
    %v552 = vrot.slane %v547, %v551
    %v570 = vunpack.c.l.b16 %v531
    %v571 = vunpack.c.l.b16 %v532
    %v572 = vunpack.c.l.b16 %v533
    %v573 = vunpack.c.l.b16 %v534
    %v574 = vunpack.c.l.b16 %v535
    %v575 = vunpack.c.l.b16 %v536
    %v576 = vunpack.c.l.b16 %v537
    %v577 = vunpack.c.l.b16 %v538
    %v578 = vunpack.c.l.b16 %v539
    %v579 = vunpack.c.l.b16 %v540
    %v580 = vunpack.c.l.b16 %v541
    %v581 = vunpack.c.l.b16 %v542
    %v582 = vunpack.c.l.b16 %v543
    %v583 = vunpack.c.l.b16 %v544
    %v584 = vunpack.c.l.b16 %v545
    %v585 = vunpack.c.l.b16 %v546
    %v586 = vpack.c.b16 %v571, %v570
    %v587 = vpack.c.b16 %v573, %v572
    %v588 = vpack.c.b16 %v575, %v574
    %v589 = vpack.c.b16 %v577, %v576
    %v590 = vpack.c.b16 %v579, %v578
    %v591 = vpack.c.b16 %v581, %v580
    %v592 = vpack.c.b16 %v583, %v582
    %v593 = vpack.c.b16 %v585, %v584
    %602 = vmatprep.subr.bf16.mxu0 0
    %603 = vmatpush1.bf16.msra.mxu0 %v586
    %604 = vmatprep.subr.bf16.mxu0 0
    %605 = vmatpush1.bf16.msra.mxu0 %v587
    %606 = vmatprep.subr.bf16.mxu0 0
    %607 = vmatpush1.bf16.msra.mxu0 %v588
    %608 = vmatprep.subr.bf16.mxu0 0
    %609 = vmatpush1.bf16.msra.mxu0 %v589
    %610 = vmatprep.subr.bf16.mxu0 0
    %611 = vmatpush1.bf16.msra.mxu0 %v590
    %612 = vmatprep.subr.bf16.mxu0 0
    %613 = vmatpush1.bf16.msra.mxu0 %v591
    %614 = vmatprep.subr.bf16.mxu0 0
    %615 = vmatpush1.bf16.msra.mxu0 %v592
    %616 = vmatprep.subr.bf16.mxu0 0
    %617 = vmatpush1.bf16.msra.mxu0 %v593
    %618 = vmatprep.subr.bf16.mxu0 0
    %619 = vmatpush1.bf16.msra.mxu0 0
    %620 = vmatprep.subr.bf16.mxu0 0
    %621 = vmatpush1.bf16.msra.mxu0 0
    %622 = vmatprep.subr.bf16.mxu0 0
    %623 = vmatpush1.bf16.msra.mxu0 0
    %624 = vmatprep.subr.bf16.mxu0 0
    %625 = vmatpush1.bf16.msra.mxu0 0
    %626 = vmatprep.subr.bf16.mxu0 0
    %627 = vmatpush1.bf16.msra.mxu0 0
    %628 = vmatprep.subr.bf16.mxu0 0
    %629 = vmatpush1.bf16.msra.mxu0 0
    %630 = vmatprep.subr.bf16.mxu0 0
    %631 = vmatpush1.bf16.msra.mxu0 0
    %632 = vmatprep.subr.bf16.mxu0 0
    %633 = vmatpush1.bf16.msra.mxu0 0
    %634 = vmatprep.mubr.bf16.mxu0 0
    %635 = vmatmul.mubr.bf16.gmra.mrb[0].mxu0 %v523
    %v636 = vpop.f32.mrb[0].mxu0
    %v637 = vadd.f32 %v552, %v636
    %v638 = vpop.f32.mrb[0].mxu0
    %v639 = vpop.f32.mrb[0].mxu0
    %v640 = vadd.f32 %v552, %v639
    %v641 = vpop.f32.mrb[0].mxu0
    %642 = vmatprep.mubr.bf16.mxu0 0
    %643 = vmatmul.mubr.bf16.gmra.mrb[0].mxu0 %v524
    %v644 = vpop.f32.mrb[0].mxu0
    %v645 = vadd.f32 %v552, %v644
    %v646 = vpop.f32.mrb[0].mxu0
    %v647 = vpop.f32.mrb[0].mxu0
    %v648 = vadd.f32 %v552, %v647
    %v649 = vpop.f32.mrb[0].mxu0
    %650 = vmatprep.mubr.bf16.mxu0 0
    %651 = vmatmul.mubr.bf16.gmra.mrb[0].mxu0 %v525
    %v652 = vpop.f32.mrb[0].mxu0
    %v653 = vadd.f32 %v552, %v652
    %v654 = vpop.f32.mrb[0].mxu0
    %v655 = vpop.f32.mrb[0].mxu0
    %v656 = vadd.f32 %v552, %v655
    %v657 = vpop.f32.mrb[0].mxu0
    %658 = vmatprep.mubr.bf16.mxu0 0
    %659 = vmatmul.mubr.bf16.gmra.mrb[0].mxu0 %v526
    %v660 = vpop.f32.mrb[0].mxu0
    %v661 = vadd.f32 %v552, %v660
    %v662 = vpop.f32.mrb[0].mxu0
    %v663 = vpop.f32.mrb[0].mxu0
    %v664 = vadd.f32 %v552, %v663
    %v665 = vpop.f32.mrb[0].mxu0
    %666 = vmatprep.mubr.bf16.mxu0 0
    %667 = vmatmul.mubr.bf16.gmra.mrb[0].mxu0 %v527
    %v668 = vpop.f32.mrb[0].mxu0
    %v669 = vadd.f32 %v552, %v668
    %v670 = vpop.f32.mrb[0].mxu0
    %v671 = vpop.f32.mrb[0].mxu0
    %v672 = vadd.f32 %v552, %v671
    %v673 = vpop.f32.mrb[0].mxu0
    %674 = vmatprep.mubr.bf16.mxu0 0
    %675 = vmatmul.mubr.bf16.gmra.mrb[0].mxu0 %v528
    %v676 = vpop.f32.mrb[0].mxu0
    %v677 = vadd.f32 %v552, %v676
    %v678 = vpop.f32.mrb[0].mxu0
    %v679 = vpop.f32.mrb[0].mxu0
    %v680 = vadd.f32 %v552, %v679
    %v681 = vpop.f32.mrb[0].mxu0
    %682 = vmatprep.mubr.bf16.mxu0 0
    %683 = vmatmul.mubr.bf16.gmra.mrb[0].mxu0 %v529
    %v684 = vpop.f32.mrb[0].mxu0
    %v685 = vadd.f32 %v552, %v684
    %v686 = vpop.f32.mrb[0].mxu0
    %v687 = vpop.f32.mrb[0].mxu0
    %v688 = vadd.f32 %v552, %v687
    %v689 = vpop.f32.mrb[0].mxu0
    %690 = vmatprep.mubr.bf16.mxu0 0
    %691 = vmatmul.mubr.bf16.gmra.mrb[0].mxu0 %v530
    %v692 = vpop.f32.mrb[0].mxu0
    %v693 = vadd.f32 %v552, %v692
    %v694 = vpop.f32.mrb[0].mxu0
    %v695 = vpop.f32.mrb[0].mxu0
    %v696 = vadd.f32 %v552, %v695
    %v697 = vpop.f32.mrb[0].mxu0
    %698 = vdwg.mxu0
    %v699 = vsub.f32 0.0, %v637
    %v700 = vsub.f32 0.0, %v640
    %v701 = vsub.f32 0.0, %v645
    %v702 = vsub.f32 0.0, %v648
    %v703 = vsub.f32 0.0, %v653
    %v704 = vsub.f32 0.0, %v656
    %v705 = vsub.f32 0.0, %v661
    %v706 = vsub.f32 0.0, %v664
    %v707 = vsub.f32 0.0, %v669
    %v708 = vsub.f32 0.0, %v672
    %v709 = vsub.f32 0.0, %v677
    %v710 = vsub.f32 0.0, %v680
    %v711 = vsub.f32 0.0, %v685
    %v712 = vsub.f32 0.0, %v688
    %v713 = vsub.f32 0.0, %v693
    %v714 = vsub.f32 0.0, %v696
    %v715 = vmul.f32 %v699, 1.442695
    %v716 = vpow.pop %v715
    %v717 = vmul.f32 %v700, 1.442695
    %v718 = vpow.pop %v717
    %v719 = vmul.f32 %v701, 1.442695
    %v720 = vpow.pop %v719
    %v721 = vmul.f32 %v702, 1.442695
    %v722 = vpow.pop %v721
    %v723 = vmul.f32 %v703, 1.442695
    %v724 = vpow.pop %v723
    %v725 = vmul.f32 %v704, 1.442695
    %v726 = vpow.pop %v725
    %v727 = vmul.f32 %v705, 1.442695
    %v728 = vpow.pop %v727
    %v729 = vmul.f32 %v706, 1.442695
    %v730 = vpow.pop %v729
    %v731 = vmul.f32 %v707, 1.442695
    %v732 = vpow.pop %v731
    %v733 = vmul.f32 %v708, 1.442695
    %v734 = vpow.pop %v733
    %v735 = vmul.f32 %v709, 1.442695
    %v736 = vpow.pop %v735
    %v737 = vmul.f32 %v710, 1.442695
    %v738 = vpow.pop %v737
    %v739 = vmul.f32 %v711, 1.442695
    %v740 = vpow.pop %v739
    %v741 = vmul.f32 %v712, 1.442695
    %v742 = vpow.pop %v741
    %v743 = vmul.f32 %v713, 1.442695
    %v744 = vpow.pop %v743
    %v745 = vmul.f32 %v714, 1.442695
    %v746 = vpow.pop %v745
    %v747 = vadd.f32 %v716, 1.0
    %v748 = vadd.f32 %v718, 1.0
    %v749 = vadd.f32 %v720, 1.0
    %v750 = vadd.f32 %v722, 1.0
    %v751 = vadd.f32 %v724, 1.0
    %v752 = vadd.f32 %v726, 1.0
    %v753 = vadd.f32 %v728, 1.0
    %v754 = vadd.f32 %v730, 1.0
    %v755 = vadd.f32 %v732, 1.0
    %v756 = vadd.f32 %v734, 1.0
    %v757 = vadd.f32 %v736, 1.0
    %v758 = vadd.f32 %v738, 1.0
    %v759 = vadd.f32 %v740, 1.0
    %v760 = vadd.f32 %v742, 1.0
    %v761 = vadd.f32 %v744, 1.0
    %v762 = vadd.f32 %v746, 1.0
    %v763 = vrcp.pop %v747
    %v764 = vrcp.pop %v748
    %v765 = vrcp.pop %v749
    %v766 = vrcp.pop %v750
    %v767 = vrcp.pop %v751
    %v768 = vrcp.pop %v752
    %v769 = vrcp.pop %v753
    %v770 = vrcp.pop %v754
    %v771 = vrcp.pop %v755
    %v772 = vrcp.pop %v756
    %v773 = vrcp.pop %v757
    %v774 = vrcp.pop %v758
    %v775 = vrcp.pop %v759
    %v776 = vrcp.pop %v760
    %v777 = vrcp.pop %v761
    %v778 = vrcp.pop %v762
    %779 = vst [vmem:[#allocation10] sm:$0xff] %v763
    %780 = vst [vmem:[#allocation10 + $0x8] sm:$0xff] %v764
    %781 = vst [vmem:[#allocation10 + $0x10] sm:$0xff] %v765
    %782 = vst [vmem:[#allocation10 + $0x18] sm:$0xff] %v766
    %783 = vst [vmem:[#allocation10 + $0x20] sm:$0xff] %v767
    %784 = vst [vmem:[#allocation10 + $0x28] sm:$0xff] %v768
    %785 = vst [vmem:[#allocation10 + $0x30] sm:$0xff] %v769
    %786 = vst [vmem:[#allocation10 + $0x38] sm:$0xff] %v770
    %787 = vst [vmem:[#allocation10 + $0x40] sm:$0xff] %v771
    %788 = vst [vmem:[#allocation10 + $0x48] sm:$0xff] %v772
    %789 = vst [vmem:[#allocation10 + $0x50] sm:$0xff] %v773
    %790 = vst [vmem:[#allocation10 + $0x58] sm:$0xff] %v774
    %791 = vst [vmem:[#allocation10 + $0x60] sm:$0xff] %v775
    %792 = vst [vmem:[#allocation10 + $0x68] sm:$0xff] %v776
    %793 = vst [vmem:[#allocation10 + $0x70] sm:$0xff] %v777
    %794 = vst [vmem:[#allocation10 + $0x78] sm:$0xff] %v778
    // Predicated region
    $region46: #{tpu_custom_call.1} parent=1 // pred_check
      _
    $region47: #{tpu_custom_call.1} parent=1 // pred_check_branch
      %796 = sbr.rel (0) target = $region49
    $region48: #{tpu_custom_call.1} parent=1 // pred_region
      %s798 = ssub.s32 2048, 2048
      %799 = vsyncadd [#allocation4], %s798
      %s800 = sshll.u32 [#allocation10], 4
      %s801 = int_to_ptr.vmem [resolvable:$true] %s800
      %806 = dma.vmem_to_hbm [thread:$0]  %s801, 2048, %s7, [#allocation4], 128, 128, 8
    $region49: #{tpu_custom_call.1} parent=1 // pred_fallthru
      _
    // Predicated region
    $region50: #{tpu_custom_call.1} parent=1 // pred_check
      _
    $region51: #{tpu_custom_call.1} parent=1 // pred_check_branch
      %808 = sbr.rel (0) target = $region53
    $region52: #{tpu_custom_call.1} parent=1 // pred_region
      %809 = dma.done [#allocation4], 2048
    $region53: #{tpu_custom_call.1} parent=1 // pred_fallthru
      _
    %810 = vsyncpa [#allocation3], 1
    %811 = vsyncpa [#allocation6], 1
    %812 = vsyncpa [#allocation9], 1
    %813 = vsyncpa [#allocation4], 1

// kernel: tpu_custom_call.1
$region0: #{tpu_custom_call.1}
  #allocation0 [shape = 'u32[]', space=smem, size = 0x4, offset = 0x4, fixed_abs, tag = 'smem constant byte address 0x4 - core index']
  #allocation1 [shape = 'u32[144,128]{1,0:T(1,128)}', space=vmem, size = 0x12000, scoped, tag = 'internal scratch']
  %s0 = inlined_call_operand.hbm [shape: bf16[128,128], index: 0, kind: input, shape index: {}]
  %s1 = inlined_call_operand.hbm [shape: bf16[128,128], index: 1, kind: input, shape index: {}]
  %s2 = inlined_call_operand.vmem [shape: f32[1,128], index: 2, kind: input, shape index: {}]
  %s3 = inlined_call_operand.hbm [shape: bf16[128,128], index: 3, kind: input, shape index: {}]
  %s4 = inlined_call_operand.vmem [shape: f32[1,128], index: 4, kind: input, shape index: {}]
  %s5 = inlined_call_operand.hbm [shape: bf16[128,128], index: 5, kind: input, shape index: {}]
  %s6 = inlined_call_operand.vmem [shape: f32[1,128], index: 6, kind: input, shape index: {}]
  %s7 = inlined_call_operand.hbm [shape: f32[128,128], index: 7, kind: output, shape index: {}]
  %s8 = sld [smem:[#allocation0]]
  $region54: #{tpu_custom_call.1} parent=0
    _
  %s10 = ssub.s32 1, %s8
  %s11 = scalar_select 0, %s10, %s8
  $region1: #{tpu_custom_call.1} parent=0
    #allocation2 [shape = 'u8[32768]{0}', space=vmem, size = 0x8000, scoped, tag = 'input window, operand 0, single buffered']
    #allocation3 [shape = 's32[1]{0}', space=sflag, size = 0x4, scoped, tag = 'scoped memory for tpu_custom_call.1']
    #allocation4 [shape = 's32[1]{0}', space=sflag, size = 0x4, scoped, tag = 'scoped memory for tpu_custom_call.1']
    #allocation5 [shape = 'u8[32768]{0}', space=vmem, size = 0x8000, scoped, tag = 'input window, operand 1, single buffered']
    #allocation6 [shape = 's32[1]{0}', space=sflag, size = 0x4, scoped, tag = 'scoped memory for tpu_custom_call.1']
    #allocation7 [shape = 'u8[32768]{0}', space=vmem, size = 0x8000, scoped, tag = 'input window, operand 3, single buffered']
    #allocation8 [shape = 'u8[32768]{0}', space=vmem, size = 0x8000, scoped, tag = 'input window, operand 5, single buffered']
    #allocation9 [shape = 's32[1]{0}', space=sflag, size = 0x4, scoped, tag = 'scoped memory for tpu_custom_call.1']
    #allocation10 [shape = 'u8[65536]{0}', space=vmem, size = 0x10000, scoped, tag = 'output window, operand 0, single buffered']
    %12 = vsyncpa [#allocation3], 0
    %13 = vsyncpa [#allocation6], 0
    %14 = vsyncpa [#allocation9], 0
    %15 = vsyncpa [#allocation4], 0
    // Predicated region
    $region2: #{tpu_custom_call.1} parent=1 // pred_check
      _
    $region3: #{tpu_custom_call.1} parent=1 // pred_check_branch
      %17 = sbr.rel (0) target = $region5
    $region4: #{tpu_custom_call.1} parent=1 // pred_region
      %s19 = ssub.s32 1024, 1024
      %20 = vsyncadd [#allocation3], %s19
      %s21 = sshll.u32 [#allocation2], 4
      %s22 = int_to_ptr.vmem [resolvable:$true] %s21
      %27 = dma.hbm_to_vmem [thread:$0]  %s0, 1024, %s22, [#allocation3], 64, 64, 4
    $region5: #{tpu_custom_call.1} parent=1 // pred_fallthru
      _
    // Predicated region
    $region6: #{tpu_custom_call.1} parent=1 // pred_check
      _
    $region7: #{tpu_custom_call.1} parent=1 // pred_check_branch
      %29 = sbr.rel (0) target = $region9
    $region8: #{tpu_custom_call.1} parent=1 // pred_region
      %s31 = ssub.s32 1024, 1024
      %32 = vsyncadd [#allocation6], %s31
      %s33 = sshll.u32 [#allocation5], 4
      %s34 = int_to_ptr.vmem [resolvable:$true] %s33
      %39 = dma.hbm_to_vmem [thread:$0]  %s1, 1024, %s34, [#allocation6], 64, 64, 4
    $region9: #{tpu_custom_call.1} parent=1 // pred_fallthru
      _
    // Predicated region
    $region10: #{tpu_custom_call.1} parent=1 // pred_check
      _
    $region11: #{tpu_custom_call.1} parent=1 // pred_check_branch
      %41 = sbr.rel (0) target = $region13
    $region12: #{tpu_custom_call.1} parent=1 // pred_region
      _
    $region13: #{tpu_custom_call.1} parent=1 // pred_fallthru
      _
    // Predicated region
    $region14: #{tpu_custom_call.1} parent=1 // pred_check
      _
    $region15: #{tpu_custom_call.1} parent=1 // pred_check_branch
      %43 = sbr.rel (0) target = $region17
    $region16: #{tpu_custom_call.1} parent=1 // pred_region
      %s45 = ssub.s32 1024, 1024
      %46 = vsyncadd [#allocation6], %s45
      %s47 = sshll.u32 [#allocation7], 4
      %s48 = int_to_ptr.vmem [resolvable:$true] %s47
      %53 = dma.hbm_to_vmem [thread:$0]  %s3, 1024, %s48, [#allocation6], 64, 64, 4
    $region17: #{tpu_custom_call.1} parent=1 // pred_fallthru
      _
    // Predicated region
    $region18: #{tpu_custom_call.1} parent=1 // pred_check
      _
    $region19: #{tpu_custom_call.1} parent=1 // pred_check_branch
      %55 = sbr.rel (0) target = $region21
    $region20: #{tpu_custom_call.1} parent=1 // pred_region
      _
    $region21: #{tpu_custom_call.1} parent=1 // pred_fallthru
      _
    // Predicated region
    $region22: #{tpu_custom_call.1} parent=1 // pred_check
      _
    $region23: #{tpu_custom_call.1} parent=1 // pred_check_branch
      %57 = sbr.rel (0) target = $region25
    $region24: #{tpu_custom_call.1} parent=1 // pred_region
      %s59 = ssub.s32 1024, 1024
      %60 = vsyncadd [#allocation9], %s59
      %s61 = sshll.u32 [#allocation8], 4
      %s62 = int_to_ptr.vmem [resolvable:$true] %s61
      %67 = dma.hbm_to_vmem [thread:$0]  %s5, 1024, %s62, [#allocation9], 64, 64, 4
    $region25: #{tpu_custom_call.1} parent=1 // pred_fallthru
      _
    // Predicated region
    $region26: #{tpu_custom_call.1} parent=1 // pred_check
      _
    $region27: #{tpu_custom_call.1} parent=1 // pred_check_branch
      %69 = sbr.rel (0) target = $region29
    $region28: #{tpu_custom_call.1} parent=1 // pred_region
      _
    $region29: #{tpu_custom_call.1} parent=1 // pred_fallthru
      _
    // Predicated region
    $region30: #{tpu_custom_call.1} parent=1 // pred_check
      _
    $region31: #{tpu_custom_call.1} parent=1 // pred_check_branch
      %71 = sbr.rel (0) target = $region33
    $region32: #{tpu_custom_call.1} parent=1 // pred_region
      %72 = dma.done [#allocation3], 1024
    $region33: #{tpu_custom_call.1} parent=1 // pred_fallthru
      _
    // Predicated region
    $region34: #{tpu_custom_call.1} parent=1 // pred_check
      _
    $region35: #{tpu_custom_call.1} parent=1 // pred_check_branch
      %74 = sbr.rel (0) target = $region37
    $region36: #{tpu_custom_call.1} parent=1 // pred_region
      %75 = dma.done [#allocation6], 1024
    $region37: #{tpu_custom_call.1} parent=1 // pred_fallthru
      _
    // Predicated region
    $region38: #{tpu_custom_call.1} parent=1 // pred_check
      _
    $region39: #{tpu_custom_call.1} parent=1 // pred_check_branch
      %77 = sbr.rel (0) target = $region41
    $region40: #{tpu_custom_call.1} parent=1 // pred_region
      %78 = dma.done [#allocation6], 1024
    $region41: #{tpu_custom_call.1} parent=1 // pred_fallthru
      _
    // Predicated region
    $region42: #{tpu_custom_call.1} parent=1 // pred_check
      _
    $region43: #{tpu_custom_call.1} parent=1 // pred_check_branch
      %80 = sbr.rel (0) target = $region45
    $region44: #{tpu_custom_call.1} parent=1 // pred_region
      %81 = dma.done [#allocation9], 1024
    $region45: #{tpu_custom_call.1} parent=1 // pred_fallthru
      _
    %v83 = vld [vmem:[#allocation2] sm:$0xf]
    %v84 = vld [vmem:[#allocation2 + $0x4] sm:$0xf]
    %v85 = vld [vmem:[#allocation2 + $0x8] sm:$0xf]
    %v86 = vld [vmem:[#allocation2 + $0xc] sm:$0xf]
    %v87 = vld [vmem:[#allocation2 + $0x10] sm:$0xf]
    %v88 = vld [vmem:[#allocation2 + $0x14] sm:$0xf]
    %v89 = vld [vmem:[#allocation2 + $0x18] sm:$0xf]
    %v90 = vld [vmem:[#allocation2 + $0x1c] sm:$0xf]
    %v91 = vld [vmem:[#allocation2 + $0x20] sm:$0xf]
    %v92 = vld [vmem:[#allocation2 + $0x24] sm:$0xf]
    %v93 = vld [vmem:[#allocation2 + $0x28] sm:$0xf]
    %v94 = vld [vmem:[#allocation2 + $0x2c] sm:$0xf]
    %v95 = vld [vmem:[#allocation2 + $0x30] sm:$0xf]
    %v96 = vld [vmem:[#allocation2 + $0x34] sm:$0xf]
    %v97 = vld [vmem:[#allocation2 + $0x38] sm:$0xf]
    %v98 = vld [vmem:[#allocation2 + $0x3c] sm:$0xf]
    %v99 = vld [vmem:[#allocation5] sm:$0xf]
    %v100 = vld [vmem:[#allocation5 + $0x4] sm:$0xf]
    %v101 = vld [vmem:[#allocation5 + $0x8] sm:$0xf]
    %v102 = vld [vmem:[#allocation5 + $0xc] sm:$0xf]
    %v103 = vld [vmem:[#allocation5 + $0x10] sm:$0xf]
    %v104 = vld [vmem:[#allocation5 + $0x14] sm:$0xf]
    %v105 = vld [vmem:[#allocation5 + $0x18] sm:$0xf]
    %v106 = vld [vmem:[#allocation5 + $0x1c] sm:$0xf]
    %v107 = vld [vmem:[#allocation5 + $0x20] sm:$0xf]
    %v108 = vld [vmem:[#allocation5 + $0x24] sm:$0xf]
    %v109 = vld [vmem:[#allocation5 + $0x28] sm:$0xf]
    %v110 = vld [vmem:[#allocation5 + $0x2c] sm:$0xf]
    %v111 = vld [vmem:[#allocation5 + $0x30] sm:$0xf]
    %v112 = vld [vmem:[#allocation5 + $0x34] sm:$0xf]
    %v113 = vld [vmem:[#allocation5 + $0x38] sm:$0xf]
    %v114 = vld [vmem:[#allocation5 + $0x3c] sm:$0xf]
    %v115 = vld [vmem:[%s2] sm:$0x1]
    %v117 = vlaneseq
    %v118 = vshrl.u32 %v117, 7
    %v119 = vsub.s32 0, %v118
    %v120 = vrot.slane %v115, %v119
    %v138 = vunpack.c.l.b16 %v83
    %v139 = vunpack.c.l.b16 %v84
    %v140 = vunpack.c.l.b16 %v85
    %v141 = vunpack.c.l.b16 %v86
    %v142 = vunpack.c.l.b16 %v87
    %v143 = vunpack.c.l.b16 %v88
    %v144 = vunpack.c.l.b16 %v89
    %v145 = vunpack.c.l.b16 %v90
    %v146 = vunpack.c.l.b16 %v91
    %v147 = vunpack.c.l.b16 %v92
    %v148 = vunpack.c.l.b16 %v93
    %v149 = vunpack.c.l.b16 %v94
    %v150 = vunpack.c.l.b16 %v95
    %v151 = vunpack.c.l.b16 %v96
    %v152 = vunpack.c.l.b16 %v97
    %v153 = vunpack.c.l.b16 %v98
    %v154 = vpack.c.b16 %v139, %v138
    %v155 = vpack.c.b16 %v141, %v140
    %v156 = vpack.c.b16 %v143, %v142
    %v157 = vpack.c.b16 %v145, %v144
    %v158 = vpack.c.b16 %v147, %v146
    %v159 = vpack.c.b16 %v149, %v148
    %v160 = vpack.c.b16 %v151, %v150
    %v161 = vpack.c.b16 %v153, %v152
    %v186 = vunpack.c.l.b16 %v99
    %v187 = vunpack.c.l.b16 %v100
    %v188 = vunpack.c.l.b16 %v101
    %v189 = vunpack.c.l.b16 %v102
    %v190 = vunpack.c.l.b16 %v103
    %v191 = vunpack.c.l.b16 %v104
    %v192 = vunpack.c.l.b16 %v105
    %v193 = vunpack.c.l.b16 %v106
    %v194 = vunpack.c.l.b16 %v107
    %v195 = vunpack.c.l.b16 %v108
    %v196 = vunpack.c.l.b16 %v109
    %v197 = vunpack.c.l.b16 %v110
    %v198 = vunpack.c.l.b16 %v111
    %v199 = vunpack.c.l.b16 %v112
    %v200 = vunpack.c.l.b16 %v113
    %v201 = vunpack.c.l.b16 %v114
    %v202 = vpack.c.b16 %v187, %v186
    %v203 = vpack.c.b16 %v189, %v188
    %v204 = vpack.c.b16 %v191, %v190
    %v205 = vpack.c.b16 %v193, %v192
    %v206 = vpack.c.b16 %v195, %v194
    %v207 = vpack.c.b16 %v197, %v196
    %v208 = vpack.c.b16 %v199, %v198
    %v209 = vpack.c.b16 %v201, %v200
    %218 = vmatprep.subr.bf16.mxu0 0
    %219 = vmatpush1.bf16.msra.mxu0 %v202
    %220 = vmatprep.subr.bf16.mxu0 0
    %221 = vmatpush1.bf16.msra.mxu0 %v203
    %222 = vmatprep.subr.bf16.mxu0 0
    %223 = vmatpush1.bf16.msra.mxu0 %v204
    %224 = vmatprep.subr.bf16.mxu0 0
    %225 = vmatpush1.bf16.msra.mxu0 %v205
    %226 = vmatprep.subr.bf16.mxu0 0
    %227 = vmatpush1.bf16.msra.mxu0 %v206
    %228 = vmatprep.subr.bf16.mxu0 0
    %229 = vmatpush1.bf16.msra.mxu0 %v207
    %230 = vmatprep.subr.bf16.mxu0 0
    %231 = vmatpush1.bf16.msra.mxu0 %v208
    %232 = vmatprep.subr.bf16.mxu0 0
    %233 = vmatpush1.bf16.msra.mxu0 %v209
    %234 = vmatprep.subr.bf16.mxu0 0
    %235 = vmatpush1.bf16.msra.mxu0 0
    %236 = vmatprep.subr.bf16.mxu0 0
    %237 = vmatpush1.bf16.msra.mxu0 0
    %238 = vmatprep.subr.bf16.mxu0 0
    %239 = vmatpush1.bf16.msra.mxu0 0
    %240 = vmatprep.subr.bf16.mxu0 0
    %241 = vmatpush1.bf16.msra.mxu0 0
    %242 = vmatprep.subr.bf16.mxu0 0
    %243 = vmatpush1.bf16.msra.mxu0 0
    %244 = vmatprep.subr.bf16.mxu0 0
    %245 = vmatpush1.bf16.msra.mxu0 0
    %246 = vmatprep.subr.bf16.mxu0 0
    %247 = vmatpush1.bf16.msra.mxu0 0
    %248 = vmatprep.subr.bf16.mxu0 0
    %249 = vmatpush1.bf16.msra.mxu0 0
    %250 = vmatprep.mubr.bf16.mxu0 0
    %251 = vmatmul.mubr.bf16.gmra.mrb[0].mxu0 %v154
    %v252 = vpop.f32.mrb[0].mxu0
    %v253 = vadd.f32 %v120, %v252
    %v254 = vpop.f32.mrb[0].mxu0
    %v255 = vpop.f32.mrb[0].mxu0
    %v256 = vadd.f32 %v120, %v255
    %v257 = vpop.f32.mrb[0].mxu0
    %258 = vmatprep.mubr.bf16.mxu0 0
    %259 = vmatmul.mubr.bf16.gmra.mrb[0].mxu0 %v155
    %v260 = vpop.f32.mrb[0].mxu0
    %v261 = vadd.f32 %v120, %v260
    %v262 = vpop.f32.mrb[0].mxu0
    %v263 = vpop.f32.mrb[0].mxu0
    %v264 = vadd.f32 %v120, %v263
    %v265 = vpop.f32.mrb[0].mxu0
    %266 = vmatprep.mubr.bf16.mxu0 0
    %267 = vmatmul.mubr.bf16.gmra.mrb[0].mxu0 %v156
    %v268 = vpop.f32.mrb[0].mxu0
    %v269 = vadd.f32 %v120, %v268
    %v270 = vpop.f32.mrb[0].mxu0
    %v271 = vpop.f32.mrb[0].mxu0
    %v272 = vadd.f32 %v120, %v271
    %v273 = vpop.f32.mrb[0].mxu0
    %274 = vmatprep.mubr.bf16.mxu0 0
    %275 = vmatmul.mubr.bf16.gmra.mrb[0].mxu0 %v157
    %v276 = vpop.f32.mrb[0].mxu0
    %v277 = vadd.f32 %v120, %v276
    %v278 = vpop.f32.mrb[0].mxu0
    %v279 = vpop.f32.mrb[0].mxu0
    %v280 = vadd.f32 %v120, %v279
    %v281 = vpop.f32.mrb[0].mxu0
    %282 = vmatprep.mubr.bf16.mxu0 0
    %283 = vmatmul.mubr.bf16.gmra.mrb[0].mxu0 %v158
    %v284 = vpop.f32.mrb[0].mxu0
    %v285 = vadd.f32 %v120, %v284
    %v286 = vpop.f32.mrb[0].mxu0
    %v287 = vpop.f32.mrb[0].mxu0
    %v288 = vadd.f32 %v120, %v287
    %v289 = vpop.f32.mrb[0].mxu0
    %290 = vmatprep.mubr.bf16.mxu0 0
    %291 = vmatmul.mubr.bf16.gmra.mrb[0].mxu0 %v159
    %v292 = vpop.f32.mrb[0].mxu0
    %v293 = vadd.f32 %v120, %v292
    %v294 = vpop.f32.mrb[0].mxu0
    %v295 = vpop.f32.mrb[0].mxu0
    %v296 = vadd.f32 %v120, %v295
    %v297 = vpop.f32.mrb[0].mxu0
    %298 = vmatprep.mubr.bf16.mxu0 0
    %299 = vmatmul.mubr.bf16.gmra.mrb[0].mxu0 %v160
    %v300 = vpop.f32.mrb[0].mxu0
    %v301 = vadd.f32 %v120, %v300
    %v302 = vpop.f32.mrb[0].mxu0
    %v303 = vpop.f32.mrb[0].mxu0
    %v304 = vadd.f32 %v120, %v303
    %v305 = vpop.f32.mrb[0].mxu0
    %306 = vmatprep.mubr.bf16.mxu0 0
    %307 = vmatmul.mubr.bf16.gmra.mrb[0].mxu0 %v161
    %v308 = vpop.f32.mrb[0].mxu0
    %v309 = vadd.f32 %v120, %v308
    %v310 = vpop.f32.mrb[0].mxu0
    %v311 = vpop.f32.mrb[0].mxu0
    %v312 = vadd.f32 %v120, %v311
    %v313 = vpop.f32.mrb[0].mxu0
    %314 = vdwg.mxu0
    %v315 = vmax.f32 %v253, 0.0
    %v316 = vmax.f32 %v256, 0.0
    %v317 = vmax.f32 %v261, 0.0
    %v318 = vmax.f32 %v264, 0.0
    %v319 = vmax.f32 %v269, 0.0
    %v320 = vmax.f32 %v272, 0.0
    %v321 = vmax.f32 %v277, 0.0
    %v322 = vmax.f32 %v280, 0.0
    %v323 = vmax.f32 %v285, 0.0
    %v324 = vmax.f32 %v288, 0.0
    %v325 = vmax.f32 %v293, 0.0
    %v326 = vmax.f32 %v296, 0.0
    %v327 = vmax.f32 %v301, 0.0
    %v328 = vmax.f32 %v304, 0.0
    %v329 = vmax.f32 %v309, 0.0
    %v330 = vmax.f32 %v312, 0.0
    %v331 = vpack.c.bf16 %v316, %v315
    %v332 = vpack.c.bf16 %v318, %v317
    %v333 = vpack.c.bf16 %v320, %v319
    %v334 = vpack.c.bf16 %v322, %v321
    %v335 = vpack.c.bf16 %v324, %v323
    %v336 = vpack.c.bf16 %v326, %v325
    %v337 = vpack.c.bf16 %v328, %v327
    %v338 = vpack.c.bf16 %v330, %v329
    %v339 = vld [vmem:[#allocation7] sm:$0xf]
    %v340 = vld [vmem:[#allocation7 + $0x4] sm:$0xf]
    %v341 = vld [vmem:[#allocation7 + $0x8] sm:$0xf]
    %v342 = vld [vmem:[#allocation7 + $0xc] sm:$0xf]
    %v343 = vld [vmem:[#allocation7 + $0x10] sm:$0xf]
    %v344 = vld [vmem:[#allocation7 + $0x14] sm:$0xf]
    %v345 = vld [vmem:[#allocation7 + $0x18] sm:$0xf]
    %v346 = vld [vmem:[#allocation7 + $0x1c] sm:$0xf]
    %v347 = vld [vmem:[#allocation7 + $0x20] sm:$0xf]
    %v348 = vld [vmem:[#allocation7 + $0x24] sm:$0xf]
    %v349 = vld [vmem:[#allocation7 + $0x28] sm:$0xf]
    %v350 = vld [vmem:[#allocation7 + $0x2c] sm:$0xf]
    %v351 = vld [vmem:[#allocation7 + $0x30] sm:$0xf]
    %v352 = vld [vmem:[#allocation7 + $0x34] sm:$0xf]
    %v353 = vld [vmem:[#allocation7 + $0x38] sm:$0xf]
    %v354 = vld [vmem:[#allocation7 + $0x3c] sm:$0xf]
    %v355 = vld [vmem:[%s4] sm:$0x1]
    %v357 = vlaneseq
    %v358 = vshrl.u32 %v357, 7
    %v359 = vsub.s32 0, %v358
    %v360 = vrot.slane %v355, %v359
    %v378 = vunpack.c.l.b16 %v339
    %v379 = vunpack.c.l.b16 %v340
    %v380 = vunpack.c.l.b16 %v341
    %v381 = vunpack.c.l.b16 %v342
    %v382 = vunpack.c.l.b16 %v343
    %v383 = vunpack.c.l.b16 %v344
    %v384 = vunpack.c.l.b16 %v345
    %v385 = vunpack.c.l.b16 %v346
    %v386 = vunpack.c.l.b16 %v347
    %v387 = vunpack.c.l.b16 %v348
    %v388 = vunpack.c.l.b16 %v349
    %v389 = vunpack.c.l.b16 %v350
    %v390 = vunpack.c.l.b16 %v351
    %v391 = vunpack.c.l.b16 %v352
    %v392 = vunpack.c.l.b16 %v353
    %v393 = vunpack.c.l.b16 %v354
    %v394 = vpack.c.b16 %v379, %v378
    %v395 = vpack.c.b16 %v381, %v380
    %v396 = vpack.c.b16 %v383, %v382
    %v397 = vpack.c.b16 %v385, %v384
    %v398 = vpack.c.b16 %v387, %v386
    %v399 = vpack.c.b16 %v389, %v388
    %v400 = vpack.c.b16 %v391, %v390
    %v401 = vpack.c.b16 %v393, %v392
    %410 = vmatprep.subr.bf16.mxu0 0
    %411 = vmatpush1.bf16.msra.mxu0 %v394
    %412 = vmatprep.subr.bf16.mxu0 0
    %413 = vmatpush1.bf16.msra.mxu0 %v395
    %414 = vmatprep.subr.bf16.mxu0 0
    %415 = vmatpush1.bf16.msra.mxu0 %v396
    %416 = vmatprep.subr.bf16.mxu0 0
    %417 = vmatpush1.bf16.msra.mxu0 %v397
    %418 = vmatprep.subr.bf16.mxu0 0
    %419 = vmatpush1.bf16.msra.mxu0 %v398
    %420 = vmatprep.subr.bf16.mxu0 0
    %421 = vmatpush1.bf16.msra.mxu0 %v399
    %422 = vmatprep.subr.bf16.mxu0 0
    %423 = vmatpush1.bf16.msra.mxu0 %v400
    %424 = vmatprep.subr.bf16.mxu0 0
    %425 = vmatpush1.bf16.msra.mxu0 %v401
    %426 = vmatprep.subr.bf16.mxu0 0
    %427 = vmatpush1.bf16.msra.mxu0 0
    %428 = vmatprep.subr.bf16.mxu0 0
    %429 = vmatpush1.bf16.msra.mxu0 0
    %430 = vmatprep.subr.bf16.mxu0 0
    %431 = vmatpush1.bf16.msra.mxu0 0
    %432 = vmatprep.subr.bf16.mxu0 0
    %433 = vmatpush1.bf16.msra.mxu0 0
    %434 = vmatprep.subr.bf16.mxu0 0
    %435 = vmatpush1.bf16.msra.mxu0 0
    %436 = vmatprep.subr.bf16.mxu0 0
    %437 = vmatpush1.bf16.msra.mxu0 0
    %438 = vmatprep.subr.bf16.mxu0 0
    %439 = vmatpush1.bf16.msra.mxu0 0
    %440 = vmatprep.subr.bf16.mxu0 0
    %441 = vmatpush1.bf16.msra.mxu0 0
    %442 = vmatprep.mubr.bf16.mxu0 0
    %443 = vmatmul.mubr.bf16.gmra.mrb[0].mxu0 %v331
    %v444 = vpop.f32.mrb[0].mxu0
    %v445 = vadd.f32 %v360, %v444
    %v446 = vpop.f32.mrb[0].mxu0
    %v447 = vpop.f32.mrb[0].mxu0
    %v448 = vadd.f32 %v360, %v447
    %v449 = vpop.f32.mrb[0].mxu0
    %450 = vmatprep.mubr.bf16.mxu0 0
    %451 = vmatmul.mubr.bf16.gmra.mrb[0].mxu0 %v332
    %v452 = vpop.f32.mrb[0].mxu0
    %v453 = vadd.f32 %v360, %v452
    %v454 = vpop.f32.mrb[0].mxu0
    %v455 = vpop.f32.mrb[0].mxu0
    %v456 = vadd.f32 %v360, %v455
    %v457 = vpop.f32.mrb[0].mxu0
    %458 = vmatprep.mubr.bf16.mxu0 0
    %459 = vmatmul.mubr.bf16.gmra.mrb[0].mxu0 %v333
    %v460 = vpop.f32.mrb[0].mxu0
    %v461 = vadd.f32 %v360, %v460
    %v462 = vpop.f32.mrb[0].mxu0
    %v463 = vpop.f32.mrb[0].mxu0
    %v464 = vadd.f32 %v360, %v463
    %v465 = vpop.f32.mrb[0].mxu0
    %466 = vmatprep.mubr.bf16.mxu0 0
    %467 = vmatmul.mubr.bf16.gmra.mrb[0].mxu0 %v334
    %v468 = vpop.f32.mrb[0].mxu0
    %v469 = vadd.f32 %v360, %v468
    %v470 = vpop.f32.mrb[0].mxu0
    %v471 = vpop.f32.mrb[0].mxu0
    %v472 = vadd.f32 %v360, %v471
    %v473 = vpop.f32.mrb[0].mxu0
    %474 = vmatprep.mubr.bf16.mxu0 0
    %475 = vmatmul.mubr.bf16.gmra.mrb[0].mxu0 %v335
    %v476 = vpop.f32.mrb[0].mxu0
    %v477 = vadd.f32 %v360, %v476
    %v478 = vpop.f32.mrb[0].mxu0
    %v479 = vpop.f32.mrb[0].mxu0
    %v480 = vadd.f32 %v360, %v479
    %v481 = vpop.f32.mrb[0].mxu0
    %482 = vmatprep.mubr.bf16.mxu0 0
    %483 = vmatmul.mubr.bf16.gmra.mrb[0].mxu0 %v336
    %v484 = vpop.f32.mrb[0].mxu0
    %v485 = vadd.f32 %v360, %v484
    %v486 = vpop.f32.mrb[0].mxu0
    %v487 = vpop.f32.mrb[0].mxu0
    %v488 = vadd.f32 %v360, %v487
    %v489 = vpop.f32.mrb[0].mxu0
    %490 = vmatprep.mubr.bf16.mxu0 0
    %491 = vmatmul.mubr.bf16.gmra.mrb[0].mxu0 %v337
    %v492 = vpop.f32.mrb[0].mxu0
    %v493 = vadd.f32 %v360, %v492
    %v494 = vpop.f32.mrb[0].mxu0
    %v495 = vpop.f32.mrb[0].mxu0
    %v496 = vadd.f32 %v360, %v495
    %v497 = vpop.f32.mrb[0].mxu0
    %498 = vmatprep.mubr.bf16.mxu0 0
    %499 = vmatmul.mubr.bf16.gmra.mrb[0].mxu0 %v338
    %v500 = vpop.f32.mrb[0].mxu0
    %v501 = vadd.f32 %v360, %v500
    %v502 = vpop.f32.mrb[0].mxu0
    %v503 = vpop.f32.mrb[0].mxu0
    %v504 = vadd.f32 %v360, %v503
    %v505 = vpop.f32.mrb[0].mxu0
    %506 = vdwg.mxu0
    %v507 = vmax.f32 %v445, 0.0
    %v508 = vmax.f32 %v448, 0.0
    %v509 = vmax.f32 %v453, 0.0
    %v510 = vmax.f32 %v456, 0.0
    %v511 = vmax.f32 %v461, 0.0
    %v512 = vmax.f32 %v464, 0.0
    %v513 = vmax.f32 %v469, 0.0
    %v514 = vmax.f32 %v472, 0.0
    %v515 = vmax.f32 %v477, 0.0
    %v516 = vmax.f32 %v480, 0.0
    %v517 = vmax.f32 %v485, 0.0
    %v518 = vmax.f32 %v488, 0.0
    %v519 = vmax.f32 %v493, 0.0
    %v520 = vmax.f32 %v496, 0.0
    %v521 = vmax.f32 %v501, 0.0
    %v522 = vmax.f32 %v504, 0.0
    %v523 = vpack.c.bf16 %v508, %v507
    %v524 = vpack.c.bf16 %v510, %v509
    %v525 = vpack.c.bf16 %v512, %v511
    %v526 = vpack.c.bf16 %v514, %v513
    %v527 = vpack.c.bf16 %v516, %v515
    %v528 = vpack.c.bf16 %v518, %v517
    %v529 = vpack.c.bf16 %v520, %v519
    %v530 = vpack.c.bf16 %v522, %v521
    %v531 = vld [vmem:[#allocation8] sm:$0xf]
    %v532 = vld [vmem:[#allocation8 + $0x4] sm:$0xf]
    %v533 = vld [vmem:[#allocation8 + $0x8] sm:$0xf]
    %v534 = vld [vmem:[#allocation8 + $0xc] sm:$0xf]
    %v535 = vld [vmem:[#allocation8 + $0x10] sm:$0xf]
    %v536 = vld [vmem:[#allocation8 + $0x14] sm:$0xf]
    %v537 = vld [vmem:[#allocation8 + $0x18] sm:$0xf]
    %v538 = vld [vmem:[#allocation8 + $0x1c] sm:$0xf]
    %v539 = vld [vmem:[#allocation8 + $0x20] sm:$0xf]
    %v540 = vld [vmem:[#allocation8 + $0x24] sm:$0xf]
    %v541 = vld [vmem:[#allocation8 + $0x28] sm:$0xf]
    %v542 = vld [vmem:[#allocation8 + $0x2c] sm:$0xf]
    %v543 = vld [vmem:[#allocation8 + $0x30] sm:$0xf]
    %v544 = vld [vmem:[#allocation8 + $0x34] sm:$0xf]
    %v545 = vld [vmem:[#allocation8 + $0x38] sm:$0xf]
    %v546 = vld [vmem:[#allocation8 + $0x3c] sm:$0xf]
    %v547 = vld [vmem:[%s6] sm:$0x1]
    %v549 = vlaneseq
    %v550 = vshrl.u32 %v549, 7
    %v551 = vsub.s32 0, %v550
    %v552 = vrot.slane %v547, %v551
    %v570 = vunpack.c.l.b16 %v531
    %v571 = vunpack.c.l.b16 %v532
    %v572 = vunpack.c.l.b16 %v533
    %v573 = vunpack.c.l.b16 %v534
    %v574 = vunpack.c.l.b16 %v535
    %v575 = vunpack.c.l.b16 %v536
    %v576 = vunpack.c.l.b16 %v537
    %v577 = vunpack.c.l.b16 %v538
    %v578 = vunpack.c.l.b16 %v539
    %v579 = vunpack.c.l.b16 %v540
    %v580 = vunpack.c.l.b16 %v541
    %v581 = vunpack.c.l.b16 %v542
    %v582 = vunpack.c.l.b16 %v543
    %v583 = vunpack.c.l.b16 %v544
    %v584 = vunpack.c.l.b16 %v545
    %v585 = vunpack.c.l.b16 %v546
    %v586 = vpack.c.b16 %v571, %v570
    %v587 = vpack.c.b16 %v573, %v572
    %v588 = vpack.c.b16 %v575, %v574
    %v589 = vpack.c.b16 %v577, %v576
    %v590 = vpack.c.b16 %v579, %v578
    %v591 = vpack.c.b16 %v581, %v580
    %v592 = vpack.c.b16 %v583, %v582
    %v593 = vpack.c.b16 %v585, %v584
    %602 = vmatprep.subr.bf16.mxu0 0
    %603 = vmatpush1.bf16.msra.mxu0 %v586
    %604 = vmatprep.subr.bf16.mxu0 0
    %605 = vmatpush1.bf16.msra.mxu0 %v587
    %606 = vmatprep.subr.bf16.mxu0 0
    %607 = vmatpush1.bf16.msra.mxu0 %v588
    %608 = vmatprep.subr.bf16.mxu0 0
    %609 = vmatpush1.bf16.msra.mxu0 %v589
    %610 = vmatprep.subr.bf16.mxu0 0
    %611 = vmatpush1.bf16.msra.mxu0 %v590
    %612 = vmatprep.subr.bf16.mxu0 0
    %613 = vmatpush1.bf16.msra.mxu0 %v591
    %614 = vmatprep.subr.bf16.mxu0 0
    %615 = vmatpush1.bf16.msra.mxu0 %v592
    %616 = vmatprep.subr.bf16.mxu0 0
    %617 = vmatpush1.bf16.msra.mxu0 %v593
    %618 = vmatprep.subr.bf16.mxu0 0
    %619 = vmatpush1.bf16.msra.mxu0 0
    %620 = vmatprep.subr.bf16.mxu0 0
    %621 = vmatpush1.bf16.msra.mxu0 0
    %622 = vmatprep.subr.bf16.mxu0 0
    %623 = vmatpush1.bf16.msra.mxu0 0
    %624 = vmatprep.subr.bf16.mxu0 0
    %625 = vmatpush1.bf16.msra.mxu0 0
    %626 = vmatprep.subr.bf16.mxu0 0
    %627 = vmatpush1.bf16.msra.mxu0 0
    %628 = vmatprep.subr.bf16.mxu0 0
    %629 = vmatpush1.bf16.msra.mxu0 0
    %630 = vmatprep.subr.bf16.mxu0 0
    %631 = vmatpush1.bf16.msra.mxu0 0
    %632 = vmatprep.subr.bf16.mxu0 0
    %633 = vmatpush1.bf16.msra.mxu0 0
    %634 = vmatprep.mubr.bf16.mxu0 0
    %635 = vmatmul.mubr.bf16.gmra.mrb[0].mxu0 %v523
    %v636 = vpop.f32.mrb[0].mxu0
    %v637 = vadd.f32 %v552, %v636
    %v638 = vpop.f32.mrb[0].mxu0
    %v639 = vpop.f32.mrb[0].mxu0
    %v640 = vadd.f32 %v552, %v639
    %v641 = vpop.f32.mrb[0].mxu0
    %642 = vmatprep.mubr.bf16.mxu0 0
    %643 = vmatmul.mubr.bf16.gmra.mrb[0].mxu0 %v524
    %v644 = vpop.f32.mrb[0].mxu0
    %v645 = vadd.f32 %v552, %v644
    %v646 = vpop.f32.mrb[0].mxu0
    %v647 = vpop.f32.mrb[0].mxu0
    %v648 = vadd.f32 %v552, %v647
    %v649 = vpop.f32.mrb[0].mxu0
    %650 = vmatprep.mubr.bf16.mxu0 0
    %651 = vmatmul.mubr.bf16.gmra.mrb[0].mxu0 %v525
    %v652 = vpop.f32.mrb[0].mxu0
    %v653 = vadd.f32 %v552, %v652
    %v654 = vpop.f32.mrb[0].mxu0
    %v655 = vpop.f32.mrb[0].mxu0
    %v656 = vadd.f32 %v552, %v655
    %v657 = vpop.f32.mrb[0].mxu0
    %658 = vmatprep.mubr.bf16.mxu0 0
    %659 = vmatmul.mubr.bf16.gmra.mrb[0].mxu0 %v526
    %v660 = vpop.f32.mrb[0].mxu0
    %v661 = vadd.f32 %v552, %v660
    %v662 = vpop.f32.mrb[0].mxu0
    %v663 = vpop.f32.mrb[0].mxu0
    %v664 = vadd.f32 %v552, %v663
    %v665 = vpop.f32.mrb[0].mxu0
    %666 = vmatprep.mubr.bf16.mxu0 0
    %667 = vmatmul.mubr.bf16.gmra.mrb[0].mxu0 %v527
    %v668 = vpop.f32.mrb[0].mxu0
    %v669 = vadd.f32 %v552, %v668
    %v670 = vpop.f32.mrb[0].mxu0
    %v671 = vpop.f32.mrb[0].mxu0
    %v672 = vadd.f32 %v552, %v671
    %v673 = vpop.f32.mrb[0].mxu0
    %674 = vmatprep.mubr.bf16.mxu0 0
    %675 = vmatmul.mubr.bf16.gmra.mrb[0].mxu0 %v528
    %v676 = vpop.f32.mrb[0].mxu0
    %v677 = vadd.f32 %v552, %v676
    %v678 = vpop.f32.mrb[0].mxu0
    %v679 = vpop.f32.mrb[0].mxu0
    %v680 = vadd.f32 %v552, %v679
    %v681 = vpop.f32.mrb[0].mxu0
    %682 = vmatprep.mubr.bf16.mxu0 0
    %683 = vmatmul.mubr.bf16.gmra.mrb[0].mxu0 %v529
    %v684 = vpop.f32.mrb[0].mxu0
    %v685 = vadd.f32 %v552, %v684
    %v686 = vpop.f32.mrb[0].mxu0
    %v687 = vpop.f32.mrb[0].mxu0
    %v688 = vadd.f32 %v552, %v687
    %v689 = vpop.f32.mrb[0].mxu0
    %690 = vmatprep.mubr.bf16.mxu0 0
    %691 = vmatmul.mubr.bf16.gmra.mrb[0].mxu0 %v530
    %v692 = vpop.f32.mrb[0].mxu0
    %v693 = vadd.f32 %v552, %v692
    %v694 = vpop.f32.mrb[0].mxu0
    %v695 = vpop.f32.mrb[0].mxu0
    %v696 = vadd.f32 %v552, %v695
    %v697 = vpop.f32.mrb[0].mxu0
    %698 = vdwg.mxu0
    %v699 = vsub.f32 0.0, %v637
    %v700 = vsub.f32 0.0, %v640
    %v701 = vsub.f32 0.0, %v645
    %v702 = vsub.f32 0.0, %v648
    %v703 = vsub.f32 0.0, %v653
    %v704 = vsub.f32 0.0, %v656
    %v705 = vsub.f32 0.0, %v661
    %v706 = vsub.f32 0.0, %v664
    %v707 = vsub.f32 0.0, %v669
    %v708 = vsub.f32 0.0, %v672
    %v709 = vsub.f32 0.0, %v677
    %v710 = vsub.f32 0.0, %v680
    %v711 = vsub.f32 0.0, %v685
    %v712 = vsub.f32 0.0, %v688
    %v713 = vsub.f32 0.0, %v693
    %v714 = vsub.f32 0.0, %v696
    %v715 = vmul.f32 %v699, 1.442695
    %v716 = vpow.pop %v715
    %v717 = vmul.f32 %v700, 1.442695
    %v718 = vpow.pop %v717
    %v719 = vmul.f32 %v701, 1.442695
    %v720 = vpow.pop %v719
    %v721 = vmul.f32 %v702, 1.442695
    %v722 = vpow.pop %v721
    %v723 = vmul.f32 %v703, 1.442695
    %v724 = vpow.pop %v723
    %v725 = vmul.f32 %v704, 1.442695
    %v726 = vpow.pop %v725
    %v727 = vmul.f32 %v705, 1.442695
    %v728 = vpow.pop %v727
    %v729 = vmul.f32 %v706, 1.442695
    %v730 = vpow.pop %v729
    %v731 = vmul.f32 %v707, 1.442695
    %v732 = vpow.pop %v731
    %v733 = vmul.f32 %v708, 1.442695
    %v734 = vpow.pop %v733
    %v735 = vmul.f32 %v709, 1.442695
    %v736 = vpow.pop %v735
    %v737 = vmul.f32 %v710, 1.442695
    %v738 = vpow.pop %v737
    %v739 = vmul.f32 %v711, 1.442695
    %v740 = vpow.pop %v739
    %v741 = vmul.f32 %v712, 1.442695
    %v742 = vpow.pop %v741
    %v743 = vmul.f32 %v713, 1.442695
    %v744 = vpow.pop %v743
    %v745 = vmul.f32 %v714, 1.442695
    %v746 = vpow.pop %v745
    %v747 = vadd.f32 %v716, 1.0
    %v748 = vadd.f32 %v718, 1.0
    %v749 = vadd.f32 %v720, 1.0
    %v750 = vadd.f32 %v722, 1.0
    %v751 = vadd.f32 %v724, 1.0
    %v752 = vadd.f32 %v726, 1.0
    %v753 = vadd.f32 %v728, 1.0
    %v754 = vadd.f32 %v730, 1.0
    %v755 = vadd.f32 %v732, 1.0
    %v756 = vadd.f32 %v734, 1.0
    %v757 = vadd.f32 %v736, 1.0
    %v758 = vadd.f32 %v738, 1.0
    %v759 = vadd.f32 %v740, 1.0
    %v760 = vadd.f32 %v742, 1.0
    %v761 = vadd.f32 %v744, 1.0
    %v762 = vadd.f32 %v746, 1.0
    %v763 = vrcp.pop %v747
    %v764 = vrcp.pop %v748
    %v765 = vrcp.pop %v749
    %v766 = vrcp.pop %v750
    %v767 = vrcp.pop %v751
    %v768 = vrcp.pop %v752
    %v769 = vrcp.pop %v753
    %v770 = vrcp.pop %v754
    %v771 = vrcp.pop %v755
    %v772 = vrcp.pop %v756
    %v773 = vrcp.pop %v757
    %v774 = vrcp.pop %v758
    %v775 = vrcp.pop %v759
    %v776 = vrcp.pop %v760
    %v777 = vrcp.pop %v761
    %v778 = vrcp.pop %v762
    %779 = vst [vmem:[#allocation10] sm:$0xff] %v763
    %780 = vst [vmem:[#allocation10 + $0x8] sm:$0xff] %v764
    %781 = vst [vmem:[#allocation10 + $0x10] sm:$0xff] %v765
    %782 = vst [vmem:[#allocation10 + $0x18] sm:$0xff] %v766
    %783 = vst [vmem:[#allocation10 + $0x20] sm:$0xff] %v767
    %784 = vst [vmem:[#allocation10 + $0x28] sm:$0xff] %v768
    %785 = vst [vmem:[#allocation10 + $0x30] sm:$0xff] %v769
    %786 = vst [vmem:[#allocation10 + $0x38] sm:$0xff] %v770
    %787 = vst [vmem:[#allocation10 + $0x40] sm:$0xff] %v771
    %788 = vst [vmem:[#allocation10 + $0x48] sm:$0xff] %v772
    %789 = vst [vmem:[#allocation10 + $0x50] sm:$0xff] %v773
    %790 = vst [vmem:[#allocation10 + $0x58] sm:$0xff] %v774
    %791 = vst [vmem:[#allocation10 + $0x60] sm:$0xff] %v775
    %792 = vst [vmem:[#allocation10 + $0x68] sm:$0xff] %v776
    %793 = vst [vmem:[#allocation10 + $0x70] sm:$0xff] %v777
    %794 = vst [vmem:[#allocation10 + $0x78] sm:$0xff] %v778
    // Predicated region
    $region46: #{tpu_custom_call.1} parent=1 // pred_check
      _
    $region47: #{tpu_custom_call.1} parent=1 // pred_check_branch
      %796 = sbr.rel (0) target = $region49
    $region48: #{tpu_custom_call.1} parent=1 // pred_region
      %s798 = ssub.s32 2048, 2048
      %799 = vsyncadd [#allocation4], %s798
      %s800 = sshll.u32 [#allocation10], 4
      %s801 = int_to_ptr.vmem [resolvable:$true] %s800
      %806 = dma.vmem_to_hbm [thread:$0]  %s801, 2048, %s7, [#allocation4], 128, 128, 8
    $region49: #{tpu_custom_call.1} parent=1 // pred_fallthru
      _
    // Predicated region
    $region50: #{tpu_custom_call.1} parent=1 // pred_check
      _
    $region51: #{tpu_custom_call.1} parent=1 // pred_check_branch
      %808 = sbr.rel (0) target = $region53
    $region52: #{tpu_custom_call.1} parent=1 // pred_region
      %809 = dma.done [#allocation4], 2048
    $region53: #{tpu_custom_call.1} parent=1 // pred_fallthru
      _
    %810 = vsyncpa [#allocation3], 1
    %811 = vsyncpa [#allocation6], 1
    %812 = vsyncpa [#allocation9], 1
    %813 = vsyncpa [#allocation4], 1

</llo_original>
